<compile_context>
chip_gen: v7x
topology: tpu7x:2x2x1
jax: 0.10.0
libtpu: 0.0.40
codegen_flags: <defaults>
</compile_context>

<pallas_src>
import math

import jax
import jax.numpy as jnp
import numpy as np
from jax.experimental import pallas as pl
from jax.experimental.pallas import tpu as pltpu

ENC_IN = 8      # 4 (emb) + 4 (one-hot action)
ENC_OUT = 32    # encoder hidden size (fixed by the module)
N_ACTIONS = 4
OUT_DIM = 4


# ----------------------------------------------------------------------------
# One-time parameter packing (single contiguous slab, gate fusion, bias merge)
# ----------------------------------------------------------------------------
def _gate_lane_width(H):
    """Per-gate lane stride in the fused (r, z, n) weight layout.

    On v6e/v7x the 256-wide MXU makes padding each gate to a full 128-lane
    vreg essentially free and it removes per-step lane relayouts from the
    serial recurrence; on v5e (128-wide MXU) keep the gates densely packed.
    """
    if H >= 128:
        return H
    try:
        kind = jax.devices()[0].device_kind.lower()
    except Exception:
        return H
    if "v6" in kind or "v7" in kind:
        return 128
    return H


def pack_params(params):
    """Pack all PredictorModel parameters into one (rows, 3*G) f32 slab."""
    H = params["w_hh"].shape[-1]
    assert H % 8 == 0, "rnn_size must be a multiple of 8"
    G = _gate_lane_width(H)
    TG = 3 * G
    LD = max(H, ENC_OUT)              # lane width of the data / output slabs

    r_wenc = 0
    r_wih = r_wenc + LD               # encoder weight padded to LD rows
    r_whh = r_wih + ENC_OUT
    r_w1 = r_whh + H
    r_w2 = r_w1 + H
    r_bias = r_w2 + H
    rows = r_bias + 8

    slab = np.zeros((rows, TG), np.float32)
    slab[0:ENC_IN, 0:ENC_OUT] = np.asarray(params["w_enc"])
    for g in range(3):
        slab[r_wih:r_wih + ENC_OUT, g * G:g * G + H] = np.asarray(params["w_ih"][g])
        slab[r_whh:r_whh + H, g * G:g * G + H] = np.asarray(params["w_hh"][g])
    slab[r_w1:r_w1 + H, 0:H] = np.asarray(params["w1"])
    slab[r_w2:r_w2 + H, 0:OUT_DIM] = np.asarray(params["w2"])

    slab[r_bias + 0, 0:ENC_OUT] = np.asarray(params["b_enc"][0])
    for g in range(3):                # fold b_hh's r/z parts into the gi bias
        b = np.asarray(params["b_ih"][g][0])
        if g < 2:
            b = b + np.asarray(params["b_hh"][g][0])
        slab[r_bias + 1, g * G:g * G + H] = b
    slab[r_bias + 2, 0:H] = np.asarray(params["b_hh"][2][0])   # b_hn (stays in loop)
    slab[r_bias + 3, 0:H] = np.asarray(params["b1"][0])
    slab[r_bias + 4, 0:OUT_DIM] = np.asarray(params["b2"][0])

    return dict(slab=jnp.asarray(slab), G=G, H=H)


# ----------------------------------------------------------------------------
# Pallas kernel: single invocation, time recurrence as a static in-kernel loop
# ----------------------------------------------------------------------------
def _make_kernel(unroll, B_pad, H, G, LD):
    TG = 3 * G
    UB = unroll * B_pad
    r_wenc = 0
    r_wih = r_wenc + LD
    r_whh = r_wih + ENC_OUT
    r_w1 = r_whh + H
    r_w2 = r_w1 + H
    r_bias = r_w2 + H

    def kernel(w_ref, d_ref, o_ref, hbuf_ref):
        # ---- one-time parameter views (all static slices of one slab) ----
        w_enc = w_ref[r_wenc:r_wenc + LD, 0:ENC_OUT]        # (LD, 32), rows 8: zero
        w_ih = w_ref[r_wih:r_wih + ENC_OUT, 0:TG]           # (32, 3G)
        w_hh = w_ref[r_whh:r_whh + H, 0:TG]                 # (H, 3G)
        w1 = w_ref[r_w1:r_w1 + H, 0:H]                      # (H, H)
        w2 = w_ref[r_w2:r_w2 + H, 0:LD]                     # (H, LD), cols 4: zero
        b_enc = w_ref[r_bias + 0:r_bias + 1, 0:ENC_OUT]     # (1, 32)
        b_gi = w_ref[r_bias + 1:r_bias + 2, 0:TG]           # (1, 3G)  b_ih + b_hh[r,z]
        b_hn = w_ref[r_bias + 2:r_bias + 3, 0:H]            # (1, H)
        b1 = w_ref[r_bias + 3:r_bias + 4, 0:H]
        b2 = w_ref[r_bias + 4:r_bias + 5, 0:LD]

        zin = d_ref[0:UB, :]                                 # (UB, LD), lanes 8: zero
        h = d_ref[UB:UB + B_pad, 0:H]                        # (B_pad, H)

        # ---- hoisted, non-recurrent compute (all unroll*B_pad rows at once) ----
        e = jnp.maximum(
            jnp.dot(zin, w_enc, preferred_element_type=jnp.float32) + b_enc, 0.0)
        gi = jnp.dot(e, w_ih, preferred_element_type=jnp.float32) + b_gi   # (UB, 3G)

        # only bias left on the serial chain; broadcast hoisted out of the loop
        b_hn_b = jnp.broadcast_to(b_hn, (B_pad, H))

        # ---- serial GRU recurrence (static trip count) ----
        for t in range(unroll):
            gi_t = gi[t * B_pad:(t + 1) * B_pad, :]          # aligned (B_pad, 3G)
            gh = jnp.dot(h, w_hh, preferred_element_type=jnp.float32)
            # fused r/z sigmoid: one EUP call covering both gate blocks
            rz = jax.nn.sigmoid(gi_t[:, 0:G + H] + gh[:, 0:G + H])
            r = rz[:, 0:H]
            zg = rz[:, G:G + H]
            n = jnp.tanh(gi_t[:, 2 * G:2 * G + H]
                         + r * (gh[:, 2 * G:2 * G + H] + b_hn_b))
            h = (1.0 - zg) * n + zg * h                      # (B_pad, H)
            hbuf_ref[t * B_pad:(t + 1) * B_pad, :] = h       # aligned scratch store

        # ---- fc head on all stored hidden states ----
        h_all = hbuf_ref[...]                                # (UB, H)
        f1 = jnp.maximum(
            jnp.dot(h_all, w1, preferred_element_type=jnp.float32) + b1, 0.0)
        out = jax.nn.sigmoid(
            jnp.dot(f1, w2, preferred_element_type=jnp.float32) + b2)     # (UB, LD)

        # ---- single combined writeback (z_pred rows + final hidden rows) ----
        o_ref[0:UB, :] = out
        if H == LD:
            o_ref[UB:UB + B_pad, :] = h
        else:
            o_ref[UB:UB + B_pad, 0:H] = h

    return kernel


# ----------------------------------------------------------------------------
# Wrapper (glue: one-hot + pad-to-8-rows + pallas_call with 2 inputs / 1 output)
# ----------------------------------------------------------------------------
def predictor_forward(packed, z, action, done, hx=None):
    del done  # unused by the PyTorch forward as well
    unroll, batch, emb = z.shape
    assert emb == 4, "PredictorModel expects emb_size == 4"
    H, G = packed["H"], packed["G"]
    LD = max(H, ENC_OUT)
    B_pad = -(-batch // 8) * 8                 # pad batch to a full sublane group
    UB = unroll * B_pad

    a = jax.nn.one_hot(action[:, :, 0], N_ACTIONS, dtype=jnp.float32)     # (U, B, 4)
    zin = jnp.concatenate([z.astype(jnp.float32), a], axis=2)             # (U, B, 8)
    zin = jnp.pad(zin, ((0, 0), (0, B_pad - batch), (0, LD - ENC_IN)))
    zin = zin.reshape(UB, LD)

    if hx is None:
        hx0 = jnp.zeros((B_pad, LD), jnp.float32)
    else:
        hx0 = jnp.pad(hx.reshape(batch, H).astype(jnp.float32),
                      ((0, B_pad - batch), (0, LD - H)))
    data = jnp.concatenate([zin, hx0], axis=0)                            # (UB+B_pad, LD)

    kernel = _make_kernel(unroll, B_pad, H, G, LD)

    out = pl.pallas_call(
        kernel,
        out_shape=jax.ShapeDtypeStruct((UB + B_pad, LD), jnp.float32),
        # no grid: the ~300 KB working set lives in VMEM for the whole call
        scratch_shapes=[pltpu.VMEM((UB, H), jnp.float32)],
    )(packed["slab"], data)

    z_pred = out[:UB, :OUT_DIM].reshape(unroll, B_pad, OUT_DIM)[:, :batch, :]
    hx_out = out[UB:UB + batch, :H][None, :, :]
    return z_pred, hx_out


# ----------------------------------------------------------------------------
# Deterministic parameter init (PyTorch-style uniform(-1/sqrt(fan_in), ...))
# ----------------------------------------------------------------------------
def init_params(key, rnn_size):
    ks = jax.random.split(key, 10)

    def u(k, shape, scale):
        return jax.random.uniform(k, shape, jnp.float32, -scale, scale)

    s_enc = 1.0 / math.sqrt(ENC_IN)
    s_gru = 1.0 / math.sqrt(rnn_size)
    s_fc = 1.0 / math.sqrt(rnn_size)
    return dict(
        w_enc=u(ks[0], (ENC_IN, ENC_OUT), s_enc),
        b_enc=u(ks[1], (1, ENC_OUT), s_enc),
        w_ih=u(ks[2], (3, ENC_OUT, rnn_size), s_gru),
        b_ih=u(ks[3], (3, 1, rnn_size), s_gru),
        w_hh=u(ks[4], (3, rnn_size, rnn_size), s_gru),
        b_hh=u(ks[5], (3, 1, rnn_size), s_gru),
        w1=u(ks[6], (rnn_size, rnn_size), s_fc),
        b1=u(ks[7], (1, rnn_size), s_fc),
        w2=u(ks[8], (rnn_size, OUT_DIM), s_fc),
        b2=u(ks[9], (1, OUT_DIM), s_fc),
    )


# ----------------------------------------------------------------------------
# Pure-JAX reference (mirrors the PyTorch forward) for a correctness check
# ----------------------------------------------------------------------------
def reference_forward(params, z, action, done, hx=None):
    del done
    unroll, batch, _ = z.shape
    H = params["w_hh"].shape[-1]
    a = jax.nn.one_hot(action[:, :, 0], N_ACTIONS, dtype=z.dtype)
    zin = jnp.concatenate([z, a], axis=2)
    e = jax.nn.relu(jnp.einsum("ubi,io->ubo", zin, params["w_enc"]) + params["b_enc"][0])
    h0 = jnp.zeros((batch, H), jnp.float32) if hx is None else hx[0]

    def step(h, x):
        i_r = x @ params["w_ih"][0] + params["b_ih"][0]
        i_z = x @ params["w_ih"][1] + params["b_ih"][1]
        i_n = x @ params["w_ih"][2] + params["b_ih"][2]
        h_r = h @ params["w_hh"][0] + params["b_hh"][0]
        h_z = h @ params["w_hh"][1] + params["b_hh"][1]
        h_n = h @ params["w_hh"][2] + params["b_hh"][2]
        r = jax.nn.sigmoid(i_r + h_r)
        zg = jax.nn.sigmoid(i_z + h_z)
        n = jnp.tanh(i_n + r * h_n)
        h_new = (1.0 - zg) * n + zg * h
        return h_new, h_new

    h_last, xs = jax.lax.scan(step, h0, e)
    f1 = jax.nn.relu(jnp.einsum("ubh,hk->ubk", xs, params["w1"]) + params["b1"][0])
    out = jax.nn.sigmoid(jnp.einsum("ubk,ko->ubo", f1, params["w2"]) + params["b2"][0])
    return out, h_last[None]


if __name__ == "__main__":
    rnn_size = 32
    unroll, batch = 8, 4

    key = jax.random.PRNGKey(0)
    kp, kz, ka = jax.random.split(key, 3)
    params = init_params(kp, rnn_size)
    packed = pack_params(params)          # one-time parameter prep (gate fusion etc.)

    z = jax.random.normal(kz, (unroll, batch, 4), jnp.float32)
    action = jax.random.randint(ka, (unroll, batch, 1), 0, N_ACTIONS, jnp.int32)
    done = jnp.zeros((unroll, batch), jnp.bool_)   # unused by forward

    z_pred, hx = predictor_forward(packed, z, action, done, hx=None)
    jax.block_until_ready((z_pred, hx))

    assert z_pred.shape == (unroll, batch, 4)
    assert hx.shape == (1, batch, rnn_size)

    z_ref, hx_ref = reference_forward(params, z, action, done, hx=None)
    np.testing.assert_allclose(np.asarray(z_pred), np.asarray(z_ref), rtol=1e-5, atol=1e-5)
    np.testing.assert_allclose(np.asarray(hx), np.asarray(hx_ref), rtol=1e-5, atol=1e-5)

    # also exercise the non-None hx path
    z_pred2, hx2 = predictor_forward(packed, z, action, done, hx=hx)
    jax.block_until_ready((z_pred2, hx2))
    z_ref2, hx_ref2 = reference_forward(params, z, action, done, hx=hx_ref)
    np.testing.assert_allclose(np.asarray(z_pred2), np.asarray(z_ref2), rtol=1e-5, atol=1e-5)
    np.testing.assert_allclose(np.asarray(hx2), np.asarray(hx_ref2), rtol=1e-5, atol=1e-5)

    print("KERNEL_OK")
</pallas_src>

<mosaic_0001>
module attributes {stable_mosaic.version = 11 : i64} {
  func.func @kernel(%arg0: memref<168x96xf32, #tpu.memory_space<vmem>>, %arg1: memref<72x32xf32, #tpu.memory_space<vmem>>, %arg2: memref<72x32xf32, #tpu.memory_space<vmem>>, %arg3: memref<64x32xf32, #tpu.memory_space<vmem>>) attributes {dimension_semantics = [], scalar_prefetch = 0 : i64, scratch_operands = 1 : i64, tpu.core_type = #tpu.core_type<tc>} {
    %c0 = arith.constant 0 : index
    %c0_0 = arith.constant 0 : index
    %0 = vector.load %arg0[%c0, %c0_0] : memref<168x96xf32, #tpu.memory_space<vmem>>, vector<32x32xf32>
    %c32 = arith.constant 32 : index
    %c0_1 = arith.constant 0 : index
    %1 = vector.load %arg0[%c32, %c0_1] : memref<168x96xf32, #tpu.memory_space<vmem>>, vector<32x96xf32>
    %c64 = arith.constant 64 : index
    %c0_2 = arith.constant 0 : index
    %2 = vector.load %arg0[%c64, %c0_2] : memref<168x96xf32, #tpu.memory_space<vmem>>, vector<32x96xf32>
    %c96 = arith.constant 96 : index
    %c0_3 = arith.constant 0 : index
    %3 = vector.load %arg0[%c96, %c0_3] : memref<168x96xf32, #tpu.memory_space<vmem>>, vector<32x32xf32>
    %c128 = arith.constant 128 : index
    %c0_4 = arith.constant 0 : index
    %4 = vector.load %arg0[%c128, %c0_4] : memref<168x96xf32, #tpu.memory_space<vmem>>, vector<32x32xf32>
    %c160 = arith.constant 160 : index
    %c0_5 = arith.constant 0 : index
    %5 = vector.load %arg0[%c160, %c0_5] : memref<168x96xf32, #tpu.memory_space<vmem>>, vector<1x32xf32>
    %c161 = arith.constant 161 : index
    %c0_6 = arith.constant 0 : index
    %6 = vector.load %arg0[%c161, %c0_6] : memref<168x96xf32, #tpu.memory_space<vmem>>, vector<1x96xf32>
    %c162 = arith.constant 162 : index
    %c0_7 = arith.constant 0 : index
    %7 = vector.load %arg0[%c162, %c0_7] : memref<168x96xf32, #tpu.memory_space<vmem>>, vector<1x32xf32>
    %c163 = arith.constant 163 : index
    %c0_8 = arith.constant 0 : index
    %8 = vector.load %arg0[%c163, %c0_8] : memref<168x96xf32, #tpu.memory_space<vmem>>, vector<1x32xf32>
    %c164 = arith.constant 164 : index
    %c0_9 = arith.constant 0 : index
    %9 = vector.load %arg0[%c164, %c0_9] : memref<168x96xf32, #tpu.memory_space<vmem>>, vector<1x32xf32>
    %c0_10 = arith.constant 0 : index
    %c0_11 = arith.constant 0 : index
    %10 = vector.load %arg1[%c0_10, %c0_11] : memref<72x32xf32, #tpu.memory_space<vmem>>, vector<64x32xf32>
    %c64_12 = arith.constant 64 : index
    %c0_13 = arith.constant 0 : index
    %11 = vector.load %arg1[%c64_12, %c0_13] : memref<72x32xf32, #tpu.memory_space<vmem>>, vector<8x32xf32>
    %cst = arith.constant dense<0.000000e+00> : vector<64x32xf32>
    %12 = tpu.matmul %10, %0, %cst {dimension_numbers = #tpu.dot_dimension_numbers<[1], [0], [0], [1], [0, 0, 1, 1], [], []>} : vector<64x32xf32>, vector<32x32xf32>, vector<64x32xf32> -> vector<64x32xf32>
    %13 = vector.broadcast %5 : vector<1x32xf32> to vector<64x32xf32>
    %14 = arith.addf %12, %13 : vector<64x32xf32>
    %cst_14 = arith.constant 0.000000e+00 : f32
    %15 = vector.broadcast %cst_14 : f32 to vector<64x32xf32>
    %16 = arith.maximumf %14, %15 : vector<64x32xf32>
    %cst_15 = arith.constant dense<0.000000e+00> : vector<64x96xf32>
    %17 = tpu.matmul %16, %1, %cst_15 {dimension_numbers = #tpu.dot_dimension_numbers<[1], [0], [0], [1], [0, 0, 1, 1], [], []>} : vector<64x32xf32>, vector<32x96xf32>, vector<64x96xf32> -> vector<64x96xf32>
    %18 = vector.broadcast %6 : vector<1x96xf32> to vector<64x96xf32>
    %19 = arith.addf %17, %18 : vector<64x96xf32>
    %20 = vector.shape_cast %7 : vector<1x32xf32> to vector<1x32xf32>
    %21 = vector.broadcast %20 : vector<1x32xf32> to vector<8x32xf32>
    %22 = vector.extract_strided_slice %19 {offsets = [0, 0], sizes = [8, 96], strides = [1, 1]} : vector<64x96xf32> to vector<8x96xf32>
    %cst_16 = arith.constant dense<0.000000e+00> : vector<8x96xf32>
    %23 = tpu.matmul %11, %2, %cst_16 {dimension_numbers = #tpu.dot_dimension_numbers<[1], [0], [0], [1], [0, 0, 1, 1], [], []>} : vector<8x32xf32>, vector<32x96xf32>, vector<8x96xf32> -> vector<8x96xf32>
    %24 = vector.extract_strided_slice %22 {offsets = [0, 0], sizes = [8, 64], strides = [1, 1]} : vector<8x96xf32> to vector<8x64xf32>
    %25 = vector.extract_strided_slice %23 {offsets = [0, 0], sizes = [8, 64], strides = [1, 1]} : vector<8x96xf32> to vector<8x64xf32>
    %26 = arith.addf %24, %25 : vector<8x64xf32>
    %27 = arith.negf %26 : vector<8x64xf32>
    %28 = math.exp %27 : vector<8x64xf32>
    %cst_17 = arith.constant 1.000000e+00 : f32
    %29 = vector.broadcast %cst_17 : f32 to vector<8x64xf32>
    %30 = arith.addf %29, %28 : vector<8x64xf32>
    %31 = arith.divf %29, %30 : vector<8x64xf32>
    %32 = vector.extract_strided_slice %31 {offsets = [0, 0], sizes = [8, 32], strides = [1, 1]} : vector<8x64xf32> to vector<8x32xf32>
    %33 = vector.extract_strided_slice %31 {offsets = [0, 32], sizes = [8, 32], strides = [1, 1]} : vector<8x64xf32> to vector<8x32xf32>
    %34 = vector.extract_strided_slice %22 {offsets = [0, 64], sizes = [8, 32], strides = [1, 1]} : vector<8x96xf32> to vector<8x32xf32>
    %35 = vector.extract_strided_slice %23 {offsets = [0, 64], sizes = [8, 32], strides = [1, 1]} : vector<8x96xf32> to vector<8x32xf32>
    %36 = arith.addf %35, %21 : vector<8x32xf32>
    %37 = arith.mulf %32, %36 : vector<8x32xf32>
    %38 = arith.addf %34, %37 : vector<8x32xf32>
    %39 = math.tanh %38 : vector<8x32xf32>
    %cst_18 = arith.constant 1.000000e+00 : f32
    %40 = vector.broadcast %cst_18 : f32 to vector<8x32xf32>
    %41 = arith.subf %40, %33 : vector<8x32xf32>
    %42 = arith.mulf %41, %39 : vector<8x32xf32>
    %43 = arith.mulf %33, %11 : vector<8x32xf32>
    %44 = arith.addf %42, %43 : vector<8x32xf32>
    %c0_19 = arith.constant 0 : index
    %c0_20 = arith.constant 0 : index
    %45 = vector.load %arg3[%c0_19, %c0_20] : memref<64x32xf32, #tpu.memory_space<vmem>>, vector<8x32xf32>
    tpu.vector_store %arg3[%c0_19, %c0_20], %44 {strides = array<i32>} : memref<64x32xf32, #tpu.memory_space<vmem>>, vector<8x32xf32>,
    %46 = vector.extract_strided_slice %19 {offsets = [8, 0], sizes = [8, 96], strides = [1, 1]} : vector<64x96xf32> to vector<8x96xf32>
    %cst_21 = arith.constant dense<0.000000e+00> : vector<8x96xf32>
    %47 = tpu.matmul %44, %2, %cst_21 {dimension_numbers = #tpu.dot_dimension_numbers<[1], [0], [0], [1], [0, 0, 1, 1], [], []>} : vector<8x32xf32>, vector<32x96xf32>, vector<8x96xf32> -> vector<8x96xf32>
    %48 = vector.extract_strided_slice %46 {offsets = [0, 0], sizes = [8, 64], strides = [1, 1]} : vector<8x96xf32> to vector<8x64xf32>
    %49 = vector.extract_strided_slice %47 {offsets = [0, 0], sizes = [8, 64], strides = [1, 1]} : vector<8x96xf32> to vector<8x64xf32>
    %50 = arith.addf %48, %49 : vector<8x64xf32>
    %51 = arith.negf %50 : vector<8x64xf32>
    %52 = math.exp %51 : vector<8x64xf32>
    %cst_22 = arith.constant 1.000000e+00 : f32
    %53 = vector.broadcast %cst_22 : f32 to vector<8x64xf32>
    %54 = arith.addf %53, %52 : vector<8x64xf32>
    %55 = arith.divf %53, %54 : vector<8x64xf32>
    %56 = vector.extract_strided_slice %55 {offsets = [0, 0], sizes = [8, 32], strides = [1, 1]} : vector<8x64xf32> to vector<8x32xf32>
    %57 = vector.extract_strided_slice %55 {offsets = [0, 32], sizes = [8, 32], strides = [1, 1]} : vector<8x64xf32> to vector<8x32xf32>
    %58 = vector.extract_strided_slice %46 {offsets = [0, 64], sizes = [8, 32], strides = [1, 1]} : vector<8x96xf32> to vector<8x32xf32>
    %59 = vector.extract_strided_slice %47 {offsets = [0, 64], sizes = [8, 32], strides = [1, 1]} : vector<8x96xf32> to vector<8x32xf32>
    %60 = arith.addf %59, %21 : vector<8x32xf32>
    %61 = arith.mulf %56, %60 : vector<8x32xf32>
    %62 = arith.addf %58, %61 : vector<8x32xf32>
    %63 = math.tanh %62 : vector<8x32xf32>
    %cst_23 = arith.constant 1.000000e+00 : f32
    %64 = vector.broadcast %cst_23 : f32 to vector<8x32xf32>
    %65 = arith.subf %64, %57 : vector<8x32xf32>
    %66 = arith.mulf %65, %63 : vector<8x32xf32>
    %67 = arith.mulf %57, %44 : vector<8x32xf32>
    %68 = arith.addf %66, %67 : vector<8x32xf32>
    %c8 = arith.constant 8 : index
    %c0_24 = arith.constant 0 : index
    %69 = vector.load %arg3[%c8, %c0_24] : memref<64x32xf32, #tpu.memory_space<vmem>>, vector<8x32xf32>
    tpu.vector_store %arg3[%c8, %c0_24], %68 {strides = array<i32>} : memref<64x32xf32, #tpu.memory_space<vmem>>, vector<8x32xf32>,
    %70 = vector.extract_strided_slice %19 {offsets = [16, 0], sizes = [8, 96], strides = [1, 1]} : vector<64x96xf32> to vector<8x96xf32>
    %cst_25 = arith.constant dense<0.000000e+00> : vector<8x96xf32>
    %71 = tpu.matmul %68, %2, %cst_25 {dimension_numbers = #tpu.dot_dimension_numbers<[1], [0], [0], [1], [0, 0, 1, 1], [], []>} : vector<8x32xf32>, vector<32x96xf32>, vector<8x96xf32> -> vector<8x96xf32>
    %72 = vector.extract_strided_slice %70 {offsets = [0, 0], sizes = [8, 64], strides = [1, 1]} : vector<8x96xf32> to vector<8x64xf32>
    %73 = vector.extract_strided_slice %71 {offsets = [0, 0], sizes = [8, 64], strides = [1, 1]} : vector<8x96xf32> to vector<8x64xf32>
    %74 = arith.addf %72, %73 : vector<8x64xf32>
    %75 = arith.negf %74 : vector<8x64xf32>
    %76 = math.exp %75 : vector<8x64xf32>
    %cst_26 = arith.constant 1.000000e+00 : f32
    %77 = vector.broadcast %cst_26 : f32 to vector<8x64xf32>
    %78 = arith.addf %77, %76 : vector<8x64xf32>
    %79 = arith.divf %77, %78 : vector<8x64xf32>
    %80 = vector.extract_strided_slice %79 {offsets = [0, 0], sizes = [8, 32], strides = [1, 1]} : vector<8x64xf32> to vector<8x32xf32>
    %81 = vector.extract_strided_slice %79 {offsets = [0, 32], sizes = [8, 32], strides = [1, 1]} : vector<8x64xf32> to vector<8x32xf32>
    %82 = vector.extract_strided_slice %70 {offsets = [0, 64], sizes = [8, 32], strides = [1, 1]} : vector<8x96xf32> to vector<8x32xf32>
    %83 = vector.extract_strided_slice %71 {offsets = [0, 64], sizes = [8, 32], strides = [1, 1]} : vector<8x96xf32> to vector<8x32xf32>
    %84 = arith.addf %83, %21 : vector<8x32xf32>
    %85 = arith.mulf %80, %84 : vector<8x32xf32>
    %86 = arith.addf %82, %85 : vector<8x32xf32>
    %87 = math.tanh %86 : vector<8x32xf32>
    %cst_27 = arith.constant 1.000000e+00 : f32
    %88 = vector.broadcast %cst_27 : f32 to vector<8x32xf32>
    %89 = arith.subf %88, %81 : vector<8x32xf32>
    %90 = arith.mulf %89, %87 : vector<8x32xf32>
    %91 = arith.mulf %81, %68 : vector<8x32xf32>
    %92 = arith.addf %90, %91 : vector<8x32xf32>
    %c16 = arith.constant 16 : index
    %c0_28 = arith.constant 0 : index
    %93 = vector.load %arg3[%c16, %c0_28] : memref<64x32xf32, #tpu.memory_space<vmem>>, vector<8x32xf32>
    tpu.vector_store %arg3[%c16, %c0_28], %92 {strides = array<i32>} : memref<64x32xf32, #tpu.memory_space<vmem>>, vector<8x32xf32>,
    %94 = vector.extract_strided_slice %19 {offsets = [24, 0], sizes = [8, 96], strides = [1, 1]} : vector<64x96xf32> to vector<8x96xf32>
    %cst_29 = arith.constant dense<0.000000e+00> : vector<8x96xf32>
    %95 = tpu.matmul %92, %2, %cst_29 {dimension_numbers = #tpu.dot_dimension_numbers<[1], [0], [0], [1], [0, 0, 1, 1], [], []>} : vector<8x32xf32>, vector<32x96xf32>, vector<8x96xf32> -> vector<8x96xf32>
    %96 = vector.extract_strided_slice %94 {offsets = [0, 0], sizes = [8, 64], strides = [1, 1]} : vector<8x96xf32> to vector<8x64xf32>
    %97 = vector.extract_strided_slice %95 {offsets = [0, 0], sizes = [8, 64], strides = [1, 1]} : vector<8x96xf32> to vector<8x64xf32>
    %98 = arith.addf %96, %97 : vector<8x64xf32>
    %99 = arith.negf %98 : vector<8x64xf32>
    %100 = math.exp %99 : vector<8x64xf32>
    %cst_30 = arith.constant 1.000000e+00 : f32
    %101 = vector.broadcast %cst_30 : f32 to vector<8x64xf32>
    %102 = arith.addf %101, %100 : vector<8x64xf32>
    %103 = arith.divf %101, %102 : vector<8x64xf32>
    %104 = vector.extract_strided_slice %103 {offsets = [0, 0], sizes = [8, 32], strides = [1, 1]} : vector<8x64xf32> to vector<8x32xf32>
    %105 = vector.extract_strided_slice %103 {offsets = [0, 32], sizes = [8, 32], strides = [1, 1]} : vector<8x64xf32> to vector<8x32xf32>
    %106 = vector.extract_strided_slice %94 {offsets = [0, 64], sizes = [8, 32], strides = [1, 1]} : vector<8x96xf32> to vector<8x32xf32>
    %107 = vector.extract_strided_slice %95 {offsets = [0, 64], sizes = [8, 32], strides = [1, 1]} : vector<8x96xf32> to vector<8x32xf32>
    %108 = arith.addf %107, %21 : vector<8x32xf32>
    %109 = arith.mulf %104, %108 : vector<8x32xf32>
    %110 = arith.addf %106, %109 : vector<8x32xf32>
    %111 = math.tanh %110 : vector<8x32xf32>
    %cst_31 = arith.constant 1.000000e+00 : f32
    %112 = vector.broadcast %cst_31 : f32 to vector<8x32xf32>
    %113 = arith.subf %112, %105 : vector<8x32xf32>
    %114 = arith.mulf %113, %111 : vector<8x32xf32>
    %115 = arith.mulf %105, %92 : vector<8x32xf32>
    %116 = arith.addf %114, %115 : vector<8x32xf32>
    %c24 = arith.constant 24 : index
    %c0_32 = arith.constant 0 : index
    %117 = vector.load %arg3[%c24, %c0_32] : memref<64x32xf32, #tpu.memory_space<vmem>>, vector<8x32xf32>
    tpu.vector_store %arg3[%c24, %c0_32], %116 {strides = array<i32>} : memref<64x32xf32, #tpu.memory_space<vmem>>, vector<8x32xf32>,
    %118 = vector.extract_strided_slice %19 {offsets = [32, 0], sizes = [8, 96], strides = [1, 1]} : vector<64x96xf32> to vector<8x96xf32>
    %cst_33 = arith.constant dense<0.000000e+00> : vector<8x96xf32>
    %119 = tpu.matmul %116, %2, %cst_33 {dimension_numbers = #tpu.dot_dimension_numbers<[1], [0], [0], [1], [0, 0, 1, 1], [], []>} : vector<8x32xf32>, vector<32x96xf32>, vector<8x96xf32> -> vector<8x96xf32>
    %120 = vector.extract_strided_slice %118 {offsets = [0, 0], sizes = [8, 64], strides = [1, 1]} : vector<8x96xf32> to vector<8x64xf32>
    %121 = vector.extract_strided_slice %119 {offsets = [0, 0], sizes = [8, 64], strides = [1, 1]} : vector<8x96xf32> to vector<8x64xf32>
    %122 = arith.addf %120, %121 : vector<8x64xf32>
    %123 = arith.negf %122 : vector<8x64xf32>
    %124 = math.exp %123 : vector<8x64xf32>
    %cst_34 = arith.constant 1.000000e+00 : f32
    %125 = vector.broadcast %cst_34 : f32 to vector<8x64xf32>
    %126 = arith.addf %125, %124 : vector<8x64xf32>
    %127 = arith.divf %125, %126 : vector<8x64xf32>
    %128 = vector.extract_strided_slice %127 {offsets = [0, 0], sizes = [8, 32], strides = [1, 1]} : vector<8x64xf32> to vector<8x32xf32>
    %129 = vector.extract_strided_slice %127 {offsets = [0, 32], sizes = [8, 32], strides = [1, 1]} : vector<8x64xf32> to vector<8x32xf32>
    %130 = vector.extract_strided_slice %118 {offsets = [0, 64], sizes = [8, 32], strides = [1, 1]} : vector<8x96xf32> to vector<8x32xf32>
    %131 = vector.extract_strided_slice %119 {offsets = [0, 64], sizes = [8, 32], strides = [1, 1]} : vector<8x96xf32> to vector<8x32xf32>
    %132 = arith.addf %131, %21 : vector<8x32xf32>
    %133 = arith.mulf %128, %132 : vector<8x32xf32>
    %134 = arith.addf %130, %133 : vector<8x32xf32>
    %135 = math.tanh %134 : vector<8x32xf32>
    %cst_35 = arith.constant 1.000000e+00 : f32
    %136 = vector.broadcast %cst_35 : f32 to vector<8x32xf32>
    %137 = arith.subf %136, %129 : vector<8x32xf32>
    %138 = arith.mulf %137, %135 : vector<8x32xf32>
    %139 = arith.mulf %129, %116 : vector<8x32xf32>
    %140 = arith.addf %138, %139 : vector<8x32xf32>
    %c32_36 = arith.constant 32 : index
    %c0_37 = arith.constant 0 : index
    %141 = vector.load %arg3[%c32_36, %c0_37] : memref<64x32xf32, #tpu.memory_space<vmem>>, vector<8x32xf32>
    tpu.vector_store %arg3[%c32_36, %c0_37], %140 {strides = array<i32>} : memref<64x32xf32, #tpu.memory_space<vmem>>, vector<8x32xf32>,
    %142 = vector.extract_strided_slice %19 {offsets = [40, 0], sizes = [8, 96], strides = [1, 1]} : vector<64x96xf32> to vector<8x96xf32>
    %cst_38 = arith.constant dense<0.000000e+00> : vector<8x96xf32>
    %143 = tpu.matmul %140, %2, %cst_38 {dimension_numbers = #tpu.dot_dimension_numbers<[1], [0], [0], [1], [0, 0, 1, 1], [], []>} : vector<8x32xf32>, vector<32x96xf32>, vector<8x96xf32> -> vector<8x96xf32>
    %144 = vector.extract_strided_slice %142 {offsets = [0, 0], sizes = [8, 64], strides = [1, 1]} : vector<8x96xf32> to vector<8x64xf32>
    %145 = vector.extract_strided_slice %143 {offsets = [0, 0], sizes = [8, 64], strides = [1, 1]} : vector<8x96xf32> to vector<8x64xf32>
    %146 = arith.addf %144, %145 : vector<8x64xf32>
    %147 = arith.negf %146 : vector<8x64xf32>
    %148 = math.exp %147 : vector<8x64xf32>
    %cst_39 = arith.constant 1.000000e+00 : f32
    %149 = vector.broadcast %cst_39 : f32 to vector<8x64xf32>
    %150 = arith.addf %149, %148 : vector<8x64xf32>
    %151 = arith.divf %149, %150 : vector<8x64xf32>
    %152 = vector.extract_strided_slice %151 {offsets = [0, 0], sizes = [8, 32], strides = [1, 1]} : vector<8x64xf32> to vector<8x32xf32>
    %153 = vector.extract_strided_slice %151 {offsets = [0, 32], sizes = [8, 32], strides = [1, 1]} : vector<8x64xf32> to vector<8x32xf32>
    %154 = vector.extract_strided_slice %142 {offsets = [0, 64], sizes = [8, 32], strides = [1, 1]} : vector<8x96xf32> to vector<8x32xf32>
    %155 = vector.extract_strided_slice %143 {offsets = [0, 64], sizes = [8, 32], strides = [1, 1]} : vector<8x96xf32> to vector<8x32xf32>
    %156 = arith.addf %155, %21 : vector<8x32xf32>
    %157 = arith.mulf %152, %156 : vector<8x32xf32>
    %158 = arith.addf %154, %157 : vector<8x32xf32>
    %159 = math.tanh %158 : vector<8x32xf32>
    %cst_40 = arith.constant 1.000000e+00 : f32
    %160 = vector.broadcast %cst_40 : f32 to vector<8x32xf32>
    %161 = arith.subf %160, %153 : vector<8x32xf32>
    %162 = arith.mulf %161, %159 : vector<8x32xf32>
    %163 = arith.mulf %153, %140 : vector<8x32xf32>
    %164 = arith.addf %162, %163 : vector<8x32xf32>
    %c40 = arith.constant 40 : index
    %c0_41 = arith.constant 0 : index
    %165 = vector.load %arg3[%c40, %c0_41] : memref<64x32xf32, #tpu.memory_space<vmem>>, vector<8x32xf32>
    tpu.vector_store %arg3[%c40, %c0_41], %164 {strides = array<i32>} : memref<64x32xf32, #tpu.memory_space<vmem>>, vector<8x32xf32>,
    %166 = vector.extract_strided_slice %19 {offsets = [48, 0], sizes = [8, 96], strides = [1, 1]} : vector<64x96xf32> to vector<8x96xf32>
    %cst_42 = arith.constant dense<0.000000e+00> : vector<8x96xf32>
    %167 = tpu.matmul %164, %2, %cst_42 {dimension_numbers = #tpu.dot_dimension_numbers<[1], [0], [0], [1], [0, 0, 1, 1], [], []>} : vector<8x32xf32>, vector<32x96xf32>, vector<8x96xf32> -> vector<8x96xf32>
    %168 = vector.extract_strided_slice %166 {offsets = [0, 0], sizes = [8, 64], strides = [1, 1]} : vector<8x96xf32> to vector<8x64xf32>
    %169 = vector.extract_strided_slice %167 {offsets = [0, 0], sizes = [8, 64], strides = [1, 1]} : vector<8x96xf32> to vector<8x64xf32>
    %170 = arith.addf %168, %169 : vector<8x64xf32>
    %171 = arith.negf %170 : vector<8x64xf32>
    %172 = math.exp %171 : vector<8x64xf32>
    %cst_43 = arith.constant 1.000000e+00 : f32
    %173 = vector.broadcast %cst_43 : f32 to vector<8x64xf32>
    %174 = arith.addf %173, %172 : vector<8x64xf32>
    %175 = arith.divf %173, %174 : vector<8x64xf32>
    %176 = vector.extract_strided_slice %175 {offsets = [0, 0], sizes = [8, 32], strides = [1, 1]} : vector<8x64xf32> to vector<8x32xf32>
    %177 = vector.extract_strided_slice %175 {offsets = [0, 32], sizes = [8, 32], strides = [1, 1]} : vector<8x64xf32> to vector<8x32xf32>
    %178 = vector.extract_strided_slice %166 {offsets = [0, 64], sizes = [8, 32], strides = [1, 1]} : vector<8x96xf32> to vector<8x32xf32>
    %179 = vector.extract_strided_slice %167 {offsets = [0, 64], sizes = [8, 32], strides = [1, 1]} : vector<8x96xf32> to vector<8x32xf32>
    %180 = arith.addf %179, %21 : vector<8x32xf32>
    %181 = arith.mulf %176, %180 : vector<8x32xf32>
    %182 = arith.addf %178, %181 : vector<8x32xf32>
    %183 = math.tanh %182 : vector<8x32xf32>
    %cst_44 = arith.constant 1.000000e+00 : f32
    %184 = vector.broadcast %cst_44 : f32 to vector<8x32xf32>
    %185 = arith.subf %184, %177 : vector<8x32xf32>
    %186 = arith.mulf %185, %183 : vector<8x32xf32>
    %187 = arith.mulf %177, %164 : vector<8x32xf32>
    %188 = arith.addf %186, %187 : vector<8x32xf32>
    %c48 = arith.constant 48 : index
    %c0_45 = arith.constant 0 : index
    %189 = vector.load %arg3[%c48, %c0_45] : memref<64x32xf32, #tpu.memory_space<vmem>>, vector<8x32xf32>
    tpu.vector_store %arg3[%c48, %c0_45], %188 {strides = array<i32>} : memref<64x32xf32, #tpu.memory_space<vmem>>, vector<8x32xf32>,
    %190 = vector.extract_strided_slice %19 {offsets = [56, 0], sizes = [8, 96], strides = [1, 1]} : vector<64x96xf32> to vector<8x96xf32>
    %cst_46 = arith.constant dense<0.000000e+00> : vector<8x96xf32>
    %191 = tpu.matmul %188, %2, %cst_46 {dimension_numbers = #tpu.dot_dimension_numbers<[1], [0], [0], [1], [0, 0, 1, 1], [], []>} : vector<8x32xf32>, vector<32x96xf32>, vector<8x96xf32> -> vector<8x96xf32>
    %192 = vector.extract_strided_slice %190 {offsets = [0, 0], sizes = [8, 64], strides = [1, 1]} : vector<8x96xf32> to vector<8x64xf32>
    %193 = vector.extract_strided_slice %191 {offsets = [0, 0], sizes = [8, 64], strides = [1, 1]} : vector<8x96xf32> to vector<8x64xf32>
    %194 = arith.addf %192, %193 : vector<8x64xf32>
    %195 = arith.negf %194 : vector<8x64xf32>
    %196 = math.exp %195 : vector<8x64xf32>
    %cst_47 = arith.constant 1.000000e+00 : f32
    %197 = vector.broadcast %cst_47 : f32 to vector<8x64xf32>
    %198 = arith.addf %197, %196 : vector<8x64xf32>
    %199 = arith.divf %197, %198 : vector<8x64xf32>
    %200 = vector.extract_strided_slice %199 {offsets = [0, 0], sizes = [8, 32], strides = [1, 1]} : vector<8x64xf32> to vector<8x32xf32>
    %201 = vector.extract_strided_slice %199 {offsets = [0, 32], sizes = [8, 32], strides = [1, 1]} : vector<8x64xf32> to vector<8x32xf32>
    %202 = vector.extract_strided_slice %190 {offsets = [0, 64], sizes = [8, 32], strides = [1, 1]} : vector<8x96xf32> to vector<8x32xf32>
    %203 = vector.extract_strided_slice %191 {offsets = [0, 64], sizes = [8, 32], strides = [1, 1]} : vector<8x96xf32> to vector<8x32xf32>
    %204 = arith.addf %203, %21 : vector<8x32xf32>
    %205 = arith.mulf %200, %204 : vector<8x32xf32>
    %206 = arith.addf %202, %205 : vector<8x32xf32>
    %207 = math.tanh %206 : vector<8x32xf32>
    %cst_48 = arith.constant 1.000000e+00 : f32
    %208 = vector.broadcast %cst_48 : f32 to vector<8x32xf32>
    %209 = arith.subf %208, %201 : vector<8x32xf32>
    %210 = arith.mulf %209, %207 : vector<8x32xf32>
    %211 = arith.mulf %201, %188 : vector<8x32xf32>
    %212 = arith.addf %210, %211 : vector<8x32xf32>
    %c56 = arith.constant 56 : index
    %c0_49 = arith.constant 0 : index
    %213 = vector.load %arg3[%c56, %c0_49] : memref<64x32xf32, #tpu.memory_space<vmem>>, vector<8x32xf32>
    tpu.vector_store %arg3[%c56, %c0_49], %212 {strides = array<i32>} : memref<64x32xf32, #tpu.memory_space<vmem>>, vector<8x32xf32>,
    %c0_50 = arith.constant 0 : index
    %c0_51 = arith.constant 0 : index
    %214 = vector.load %arg3[%c0_50, %c0_51] : memref<64x32xf32, #tpu.memory_space<vmem>>, vector<64x32xf32>
    %cst_52 = arith.constant dense<0.000000e+00> : vector<64x32xf32>
    %215 = tpu.matmul %214, %3, %cst_52 {dimension_numbers = #tpu.dot_dimension_numbers<[1], [0], [0], [1], [0, 0, 1, 1], [], []>} : vector<64x32xf32>, vector<32x32xf32>, vector<64x32xf32> -> vector<64x32xf32>
    %216 = vector.broadcast %8 : vector<1x32xf32> to vector<64x32xf32>
    %217 = arith.addf %215, %216 : vector<64x32xf32>
    %cst_53 = arith.constant 0.000000e+00 : f32
    %218 = vector.broadcast %cst_53 : f32 to vector<64x32xf32>
    %219 = arith.maximumf %217, %218 : vector<64x32xf32>
    %cst_54 = arith.constant dense<0.000000e+00> : vector<64x32xf32>
    %220 = tpu.matmul %219, %4, %cst_54 {dimension_numbers = #tpu.dot_dimension_numbers<[1], [0], [0], [1], [0, 0, 1, 1], [], []>} : vector<64x32xf32>, vector<32x32xf32>, vector<64x32xf32> -> vector<64x32xf32>
    %221 = vector.broadcast %9 : vector<1x32xf32> to vector<64x32xf32>
    %222 = arith.addf %220, %221 : vector<64x32xf32>
    %223 = arith.negf %222 : vector<64x32xf32>
    %224 = math.exp %223 : vector<64x32xf32>
    %cst_55 = arith.constant 1.000000e+00 : f32
    %225 = vector.broadcast %cst_55 : f32 to vector<64x32xf32>
    %226 = arith.addf %225, %224 : vector<64x32xf32>
    %227 = arith.divf %225, %226 : vector<64x32xf32>
    %c0_56 = arith.constant 0 : index
    %c0_57 = arith.constant 0 : index
    %228 = vector.load %arg2[%c0_56, %c0_57] : memref<72x32xf32, #tpu.memory_space<vmem>>, vector<64x32xf32>
    tpu.vector_store %arg2[%c0_56, %c0_57], %227 {strides = array<i32>} : memref<72x32xf32, #tpu.memory_space<vmem>>, vector<64x32xf32>,
    %c64_58 = arith.constant 64 : index
    %c0_59 = arith.constant 0 : index
    %229 = vector.load %arg2[%c64_58, %c0_59] : memref<72x32xf32, #tpu.memory_space<vmem>>, vector<8x32xf32>
    tpu.vector_store %arg2[%c64_58, %c0_59], %212 {strides = array<i32>} : memref<72x32xf32, #tpu.memory_space<vmem>>, vector<8x32xf32>,
    return
  }
}

</mosaic_0001>

<llo_original>
// kernel: tpu_custom_call.1
$region0: #{tpu_custom_call.1}
  #allocation0 [shape = 'u32[]', space=smem, size = 0x4, offset = 0x4, fixed_abs, tag = 'smem constant byte address 0x4 - core index']
  #allocation1 [shape = 'u32[144,128]{1,0:T(1,128)}', space=vmem, size = 0x12000, scoped, tag = 'internal scratch']
  #allocation2 [shape = 'f32[64,32]{1,0:T(8,128)}', space=vmem, size = 0x8000, scoped, tag = 'scratch operand']
  %s0 = inlined_call_operand.hbm [shape: f32[168,96], index: 0, kind: input, shape index: {}]
  %s1 = inlined_call_operand.vmem [shape: f32[72,32], index: 1, kind: input, shape index: {}]
  %s2 = inlined_call_operand.vmem [shape: f32[72,32], index: 2, kind: output, shape index: {}]
  %s3 = sld [smem:[#allocation0]]
  $region22: #{tpu_custom_call.1} parent=0
    _
  %s5 = ssub.s32 1, %s3
  %s6 = scalar_select 0, %s5, %s3
  $region1: #{tpu_custom_call.1} parent=0
    #allocation3 [shape = 'u8[86016]{0}', space=vmem, size = 0x15000, scoped, tag = 'input window, operand 0, single buffered']
    #allocation4 [shape = 's32[1]{0}', space=sflag, size = 0x4, scoped, tag = 'scoped memory for tpu_custom_call.1']
    %7 = vsyncpa [#allocation4], 0
    // Predicated region
    $region2: #{tpu_custom_call.1} parent=1 // pred_check
      _
    $region3: #{tpu_custom_call.1} parent=1 // pred_check_branch
      %9 = sbr.rel (0) target = $region5
    $region4: #{tpu_custom_call.1} parent=1 // pred_region
      %s11 = ssub.s32 2688, 2688
      %12 = vsyncadd [#allocation4], %s11
      %s13 = sshll.u32 [#allocation3], 4
      %s14 = int_to_ptr.vmem [resolvable:$true] %s13
      %19 = dma.hbm_to_vmem [thread:$0]  %s0, 2688, %s14, [#allocation4], 128, 128, 8
    $region5: #{tpu_custom_call.1} parent=1 // pred_fallthru
      _
    // Predicated region
    $region6: #{tpu_custom_call.1} parent=1 // pred_check
      _
    $region7: #{tpu_custom_call.1} parent=1 // pred_check_branch
      %21 = sbr.rel (0) target = $region9
    $region8: #{tpu_custom_call.1} parent=1 // pred_region
      _
    $region9: #{tpu_custom_call.1} parent=1 // pred_fallthru
      _
    // Predicated region
    $region10: #{tpu_custom_call.1} parent=1 // pred_check
      _
    $region11: #{tpu_custom_call.1} parent=1 // pred_check_branch
      %23 = sbr.rel (0) target = $region13
    $region12: #{tpu_custom_call.1} parent=1 // pred_region
      %24 = dma.done [#allocation4], 2688
    $region13: #{tpu_custom_call.1} parent=1 // pred_fallthru
      _
    %v25 = vld [vmem:[#allocation3] sm:$0xff]
    %v26 = vld [vmem:[#allocation3 + $0x8] sm:$0xff]
    %v27 = vld [vmem:[#allocation3 + $0x10] sm:$0xff]
    %v28 = vld [vmem:[#allocation3 + $0x18] sm:$0xff]
    %v29 = vld [vmem:[#allocation3 + $0x20] sm:$0xff]
    %v30 = vld [vmem:[#allocation3 + $0x28] sm:$0xff]
    %v31 = vld [vmem:[#allocation3 + $0x30] sm:$0xff]
    %v32 = vld [vmem:[#allocation3 + $0x38] sm:$0xff]
    %v33 = vld [vmem:[#allocation3 + $0x40] sm:$0xff]
    %v34 = vld [vmem:[#allocation3 + $0x48] sm:$0xff]
    %v35 = vld [vmem:[#allocation3 + $0x50] sm:$0xff]
    %v36 = vld [vmem:[#allocation3 + $0x58] sm:$0xff]
    %v37 = vld [vmem:[#allocation3 + $0x60] sm:$0xff]
    %v38 = vld [vmem:[#allocation3 + $0x68] sm:$0xff]
    %v39 = vld [vmem:[#allocation3 + $0x70] sm:$0xff]
    %v40 = vld [vmem:[#allocation3 + $0x78] sm:$0xff]
    %v41 = vld [vmem:[#allocation3 + $0x80] sm:$0xff]
    %v42 = vld [vmem:[#allocation3 + $0x88] sm:$0xff]
    %v43 = vld [vmem:[#allocation3 + $0x90] sm:$0xff]
    %v44 = vld [vmem:[#allocation3 + $0x98] sm:$0xff]
    %v45 = vld [vmem:[#allocation3 + $0xa0] sm:$0x1]
    %v46 = vld [vmem:[#allocation3 + $0xa1] sm:$0x1]
    %v47 = vld [vmem:[#allocation3 + $0xa2] sm:$0x1]
    %v48 = vld [vmem:[#allocation3 + $0xa3] sm:$0x1]
    %v49 = vld [vmem:[#allocation3 + $0xa4] sm:$0x1]
    %v50 = vld [vmem:[%s1] sm:$0xff]
    %v51 = vld [vmem:[%s1 + $0x8] sm:$0xff]
    %v52 = vld [vmem:[%s1 + $0x10] sm:$0xff]
    %v53 = vld [vmem:[%s1 + $0x18] sm:$0xff]
    %v54 = vld [vmem:[%s1 + $0x20] sm:$0xff]
    %v55 = vld [vmem:[%s1 + $0x28] sm:$0xff]
    %v56 = vld [vmem:[%s1 + $0x30] sm:$0xff]
    %v57 = vld [vmem:[%s1 + $0x38] sm:$0xff]
    %v58 = vld [vmem:[%s1 + $0x40] sm:$0xff]
    %v59 = vlaneseq
    %v60 = vshrl.u32 %v59, 7
    %v61 = vsub.s32 0, %v60
    %v62 = vrot.slane %v45, %v61
    %vm63 = vcmask 261120
    %v65 = vsel %vm63, %v50, 0
    %v68 = vsel %vm63, %v51, 0
    %v71 = vsel %vm63, %v52, 0
    %v74 = vsel %vm63, %v53, 0
    %v77 = vsel %vm63, %v54, 0
    %v80 = vsel %vm63, %v55, 0
    %v83 = vsel %vm63, %v56, 0
    %v86 = vsel %vm63, %v57, 0
    %88 = vmatprep.subr.mxu0 0.0
    %89 = vmatpush1.msra.mxu0 %v25
    %90 = vmatprep.subr.mxu0 0.0
    %91 = vmatpush1.msra.mxu0 %v26
    %92 = vmatprep.subr.mxu0 0.0
    %93 = vmatpush1.msra.mxu0 %v27
    %94 = vmatprep.subr.mxu0 0.0
    %95 = vmatpush1.msra.mxu0 %v28
    %96 = vmatprep.subr.mxu0 0.0
    %97 = vmatpush1.msra.mxu0 0.0
    %98 = vmatprep.subr.mxu0 0.0
    %99 = vmatpush1.msra.mxu0 0.0
    %100 = vmatprep.subr.mxu0 0.0
    %101 = vmatpush1.msra.mxu0 0.0
    %102 = vmatprep.subr.mxu0 0.0
    %103 = vmatpush1.msra.mxu0 0.0
    %104 = vmatprep.subr.mxu0 0.0
    %105 = vmatpush1.msra.mxu0 0.0
    %106 = vmatprep.subr.mxu0 0.0
    %107 = vmatpush1.msra.mxu0 0.0
    %108 = vmatprep.subr.mxu0 0.0
    %109 = vmatpush1.msra.mxu0 0.0
    %110 = vmatprep.subr.mxu0 0.0
    %111 = vmatpush1.msra.mxu0 0.0
    %112 = vmatprep.subr.mxu0 0.0
    %113 = vmatpush1.msra.mxu0 0.0
    %114 = vmatprep.subr.mxu0 0.0
    %115 = vmatpush1.msra.mxu0 0.0
    %116 = vmatprep.subr.mxu0 0.0
    %117 = vmatpush1.msra.mxu0 0.0
    %118 = vmatprep.subr.mxu0 0.0
    %119 = vmatpush1.msra.mxu0 0.0
    %120 = vmatprep.subr.mxu0 0.0
    %121 = vmatpush1.msra.mxu0 0.0
    %122 = vmatprep.subr.mxu0 0.0
    %123 = vmatpush1.msra.mxu0 0.0
    %124 = vmatprep.subr.mxu0 0.0
    %125 = vmatpush1.msra.mxu0 0.0
    %126 = vmatprep.subr.mxu0 0.0
    %127 = vmatpush1.msra.mxu0 0.0
    %128 = vmatprep.subr.mxu0 0.0
    %129 = vmatpush1.msra.mxu0 0.0
    %130 = vmatprep.subr.mxu0 0.0
    %131 = vmatpush1.msra.mxu0 0.0
    %132 = vmatprep.subr.mxu0 0.0
    %133 = vmatpush1.msra.mxu0 0.0
    %134 = vmatprep.subr.mxu0 0.0
    %135 = vmatpush1.msra.mxu0 0.0
    %136 = vmatprep.subr.mxu0 0.0
    %137 = vmatpush1.msra.mxu0 0.0
    %138 = vmatprep.subr.mxu0 0.0
    %139 = vmatpush1.msra.mxu0 0.0
    %140 = vmatprep.subr.mxu0 0.0
    %141 = vmatpush1.msra.mxu0 0.0
    %142 = vmatprep.subr.mxu0 0.0
    %143 = vmatpush1.msra.mxu0 0.0
    %144 = vmatprep.subr.mxu0 0.0
    %145 = vmatpush1.msra.mxu0 0.0
    %146 = vmatprep.subr.mxu0 0.0
    %147 = vmatpush1.msra.mxu0 0.0
    %148 = vmatprep.subr.mxu0 0.0
    %149 = vmatpush1.msra.mxu0 0.0
    %150 = vmatprep.subr.mxu0 0.0
    %151 = vmatpush1.msra.mxu0 0.0
    %152 = vmatprep.mubr.f32.mxu0 0.0
    %153 = vmatmul.mubr.f32.gmra.mrb[0].mxu0 %v65
    %v154 = vpop.f32.mrb[0].mxu0
    %v155 = vadd.f32 %v62, %v154
    %v156 = vpop.f32.mrb[0].mxu0
    %157 = vmatprep.mubr.f32.mxu0 0.0
    %158 = vmatmul.mubr.f32.gmra.mrb[0].mxu0 %v68
    %v159 = vpop.f32.mrb[0].mxu0
    %v160 = vadd.f32 %v62, %v159
    %v161 = vpop.f32.mrb[0].mxu0
    %162 = vmatprep.mubr.f32.mxu0 0.0
    %163 = vmatmul.mubr.f32.gmra.mrb[0].mxu0 %v71
    %v164 = vpop.f32.mrb[0].mxu0
    %v165 = vadd.f32 %v62, %v164
    %v166 = vpop.f32.mrb[0].mxu0
    %167 = vmatprep.mubr.f32.mxu0 0.0
    %168 = vmatmul.mubr.f32.gmra.mrb[0].mxu0 %v74
    %v169 = vpop.f32.mrb[0].mxu0
    %v170 = vadd.f32 %v62, %v169
    %v171 = vpop.f32.mrb[0].mxu0
    %172 = vmatprep.mubr.f32.mxu0 0.0
    %173 = vmatmul.mubr.f32.gmra.mrb[0].mxu0 %v77
    %v174 = vpop.f32.mrb[0].mxu0
    %v175 = vadd.f32 %v62, %v174
    %v176 = vpop.f32.mrb[0].mxu0
    %177 = vmatprep.mubr.f32.mxu0 0.0
    %178 = vmatmul.mubr.f32.gmra.mrb[0].mxu0 %v80
    %v179 = vpop.f32.mrb[0].mxu0
    %v180 = vadd.f32 %v62, %v179
    %v181 = vpop.f32.mrb[0].mxu0
    %182 = vmatprep.mubr.f32.mxu0 0.0
    %183 = vmatmul.mubr.f32.gmra.mrb[0].mxu0 %v83
    %v184 = vpop.f32.mrb[0].mxu0
    %v185 = vadd.f32 %v62, %v184
    %v186 = vpop.f32.mrb[0].mxu0
    %187 = vmatprep.mubr.f32.mxu0 0.0
    %188 = vmatmul.mubr.f32.gmra.mrb[0].mxu0 %v86
    %v189 = vpop.f32.mrb[0].mxu0
    %v190 = vadd.f32 %v62, %v189
    %v191 = vpop.f32.mrb[0].mxu0
    %192 = vdwg.mxu0
    %v193 = vmax.f32 %v155, 0.0
    %v194 = vmax.f32 %v160, 0.0
    %v195 = vmax.f32 %v165, 0.0
    %v196 = vmax.f32 %v170, 0.0
    %v197 = vmax.f32 %v175, 0.0
    %v198 = vmax.f32 %v180, 0.0
    %v199 = vmax.f32 %v185, 0.0
    %v200 = vmax.f32 %v190, 0.0
    %v201 = vlaneseq
    %v202 = vshrl.u32 %v201, 7
    %v203 = vsub.s32 0, %v202
    %v204 = vrot.slane %v46, %v203
    %v206 = vsel %vm63, %v193, 0
    %v209 = vsel %vm63, %v194, 0
    %v212 = vsel %vm63, %v195, 0
    %v215 = vsel %vm63, %v196, 0
    %v218 = vsel %vm63, %v197, 0
    %v221 = vsel %vm63, %v198, 0
    %v224 = vsel %vm63, %v199, 0
    %v227 = vsel %vm63, %v200, 0
    %229 = vmatprep.subr.mxu0 0.0
    %230 = vmatpush1.msra.mxu0 %v29
    %231 = vmatprep.subr.mxu0 0.0
    %232 = vmatpush1.msra.mxu0 %v30
    %233 = vmatprep.subr.mxu0 0.0
    %234 = vmatpush1.msra.mxu0 %v31
    %235 = vmatprep.subr.mxu0 0.0
    %236 = vmatpush1.msra.mxu0 %v32
    %237 = vmatprep.subr.mxu0 0.0
    %238 = vmatpush1.msra.mxu0 0.0
    %239 = vmatprep.subr.mxu0 0.0
    %240 = vmatpush1.msra.mxu0 0.0
    %241 = vmatprep.subr.mxu0 0.0
    %242 = vmatpush1.msra.mxu0 0.0
    %243 = vmatprep.subr.mxu0 0.0
    %244 = vmatpush1.msra.mxu0 0.0
    %245 = vmatprep.subr.mxu0 0.0
    %246 = vmatpush1.msra.mxu0 0.0
    %247 = vmatprep.subr.mxu0 0.0
    %248 = vmatpush1.msra.mxu0 0.0
    %249 = vmatprep.subr.mxu0 0.0
    %250 = vmatpush1.msra.mxu0 0.0
    %251 = vmatprep.subr.mxu0 0.0
    %252 = vmatpush1.msra.mxu0 0.0
    %253 = vmatprep.subr.mxu0 0.0
    %254 = vmatpush1.msra.mxu0 0.0
    %255 = vmatprep.subr.mxu0 0.0
    %256 = vmatpush1.msra.mxu0 0.0
    %257 = vmatprep.subr.mxu0 0.0
    %258 = vmatpush1.msra.mxu0 0.0
    %259 = vmatprep.subr.mxu0 0.0
    %260 = vmatpush1.msra.mxu0 0.0
    %261 = vmatprep.subr.mxu0 0.0
    %262 = vmatpush1.msra.mxu0 0.0
    %263 = vmatprep.subr.mxu0 0.0
    %264 = vmatpush1.msra.mxu0 0.0
    %265 = vmatprep.subr.mxu0 0.0
    %266 = vmatpush1.msra.mxu0 0.0
    %267 = vmatprep.subr.mxu0 0.0
    %268 = vmatpush1.msra.mxu0 0.0
    %269 = vmatprep.subr.mxu0 0.0
    %270 = vmatpush1.msra.mxu0 0.0
    %271 = vmatprep.subr.mxu0 0.0
    %272 = vmatpush1.msra.mxu0 0.0
    %273 = vmatprep.subr.mxu0 0.0
    %274 = vmatpush1.msra.mxu0 0.0
    %275 = vmatprep.subr.mxu0 0.0
    %276 = vmatpush1.msra.mxu0 0.0
    %277 = vmatprep.subr.mxu0 0.0
    %278 = vmatpush1.msra.mxu0 0.0
    %279 = vmatprep.subr.mxu0 0.0
    %280 = vmatpush1.msra.mxu0 0.0
    %281 = vmatprep.subr.mxu0 0.0
    %282 = vmatpush1.msra.mxu0 0.0
    %283 = vmatprep.subr.mxu0 0.0
    %284 = vmatpush1.msra.mxu0 0.0
    %285 = vmatprep.subr.mxu0 0.0
    %286 = vmatpush1.msra.mxu0 0.0
    %287 = vmatprep.subr.mxu0 0.0
    %288 = vmatpush1.msra.mxu0 0.0
    %289 = vmatprep.subr.mxu0 0.0
    %290 = vmatpush1.msra.mxu0 0.0
    %291 = vmatprep.subr.mxu0 0.0
    %292 = vmatpush1.msra.mxu0 0.0
    %293 = vmatprep.mubr.f32.mxu0 0.0
    %294 = vmatmul.mubr.f32.gmra.mrb[0].mxu0 %v206
    %v295 = vpop.f32.mrb[0].mxu0
    %v296 = vadd.f32 %v204, %v295
    %v297 = vpop.f32.mrb[0].mxu0
    %298 = vmatprep.mubr.f32.mxu0 0.0
    %299 = vmatmul.mubr.f32.gmra.mrb[0].mxu0 %v209
    %v300 = vpop.f32.mrb[0].mxu0
    %v301 = vadd.f32 %v204, %v300
    %v302 = vpop.f32.mrb[0].mxu0
    %303 = vmatprep.mubr.f32.mxu0 0.0
    %304 = vmatmul.mubr.f32.gmra.mrb[0].mxu0 %v212
    %v305 = vpop.f32.mrb[0].mxu0
    %v306 = vadd.f32 %v204, %v305
    %v307 = vpop.f32.mrb[0].mxu0
    %308 = vmatprep.mubr.f32.mxu0 0.0
    %309 = vmatmul.mubr.f32.gmra.mrb[0].mxu0 %v215
    %v310 = vpop.f32.mrb[0].mxu0
    %v311 = vadd.f32 %v204, %v310
    %v312 = vpop.f32.mrb[0].mxu0
    %313 = vmatprep.mubr.f32.mxu0 0.0
    %314 = vmatmul.mubr.f32.gmra.mrb[0].mxu0 %v218
    %v315 = vpop.f32.mrb[0].mxu0
    %v316 = vadd.f32 %v204, %v315
    %v317 = vpop.f32.mrb[0].mxu0
    %318 = vmatprep.mubr.f32.mxu0 0.0
    %319 = vmatmul.mubr.f32.gmra.mrb[0].mxu0 %v221
    %v320 = vpop.f32.mrb[0].mxu0
    %v321 = vadd.f32 %v204, %v320
    %v322 = vpop.f32.mrb[0].mxu0
    %323 = vmatprep.mubr.f32.mxu0 0.0
    %324 = vmatmul.mubr.f32.gmra.mrb[0].mxu0 %v224
    %v325 = vpop.f32.mrb[0].mxu0
    %v326 = vadd.f32 %v204, %v325
    %v327 = vpop.f32.mrb[0].mxu0
    %328 = vmatprep.mubr.f32.mxu0 0.0
    %329 = vmatmul.mubr.f32.gmra.mrb[0].mxu0 %v227
    %v330 = vpop.f32.mrb[0].mxu0
    %v331 = vadd.f32 %v204, %v330
    %v332 = vpop.f32.mrb[0].mxu0
    %333 = vdwg.mxu0
    %v334 = vlaneseq
    %v335 = vshrl.u32 %v334, 7
    %v336 = vsub.s32 0, %v335
    %v337 = vrot.slane %v47, %v336
    %v339 = vsel %vm63, %v58, 0
    %341 = vmatprep.subr.mxu0 0.0
    %342 = vmatpush1.msra.mxu0 %v33
    %343 = vmatprep.subr.mxu0 0.0
    %344 = vmatpush1.msra.mxu0 %v34
    %345 = vmatprep.subr.mxu0 0.0
    %346 = vmatpush1.msra.mxu0 %v35
    %347 = vmatprep.subr.mxu0 0.0
    %348 = vmatpush1.msra.mxu0 %v36
    %349 = vmatprep.subr.mxu0 0.0
    %350 = vmatpush1.msra.mxu0 0.0
    %351 = vmatprep.subr.mxu0 0.0
    %352 = vmatpush1.msra.mxu0 0.0
    %353 = vmatprep.subr.mxu0 0.0
    %354 = vmatpush1.msra.mxu0 0.0
    %355 = vmatprep.subr.mxu0 0.0
    %356 = vmatpush1.msra.mxu0 0.0
    %357 = vmatprep.subr.mxu0 0.0
    %358 = vmatpush1.msra.mxu0 0.0
    %359 = vmatprep.subr.mxu0 0.0
    %360 = vmatpush1.msra.mxu0 0.0
    %361 = vmatprep.subr.mxu0 0.0
    %362 = vmatpush1.msra.mxu0 0.0
    %363 = vmatprep.subr.mxu0 0.0
    %364 = vmatpush1.msra.mxu0 0.0
    %365 = vmatprep.subr.mxu0 0.0
    %366 = vmatpush1.msra.mxu0 0.0
    %367 = vmatprep.subr.mxu0 0.0
    %368 = vmatpush1.msra.mxu0 0.0
    %369 = vmatprep.subr.mxu0 0.0
    %370 = vmatpush1.msra.mxu0 0.0
    %371 = vmatprep.subr.mxu0 0.0
    %372 = vmatpush1.msra.mxu0 0.0
    %373 = vmatprep.subr.mxu0 0.0
    %374 = vmatpush1.msra.mxu0 0.0
    %375 = vmatprep.subr.mxu0 0.0
    %376 = vmatpush1.msra.mxu0 0.0
    %377 = vmatprep.subr.mxu0 0.0
    %378 = vmatpush1.msra.mxu0 0.0
    %379 = vmatprep.subr.mxu0 0.0
    %380 = vmatpush1.msra.mxu0 0.0
    %381 = vmatprep.subr.mxu0 0.0
    %382 = vmatpush1.msra.mxu0 0.0
    %383 = vmatprep.subr.mxu0 0.0
    %384 = vmatpush1.msra.mxu0 0.0
    %385 = vmatprep.subr.mxu0 0.0
    %386 = vmatpush1.msra.mxu0 0.0
    %387 = vmatprep.subr.mxu0 0.0
    %388 = vmatpush1.msra.mxu0 0.0
    %389 = vmatprep.subr.mxu0 0.0
    %390 = vmatpush1.msra.mxu0 0.0
    %391 = vmatprep.subr.mxu0 0.0
    %392 = vmatpush1.msra.mxu0 0.0
    %393 = vmatprep.subr.mxu0 0.0
    %394 = vmatpush1.msra.mxu0 0.0
    %395 = vmatprep.subr.mxu0 0.0
    %396 = vmatpush1.msra.mxu0 0.0
    %397 = vmatprep.subr.mxu0 0.0
    %398 = vmatpush1.msra.mxu0 0.0
    %399 = vmatprep.subr.mxu0 0.0
    %400 = vmatpush1.msra.mxu0 0.0
    %401 = vmatprep.subr.mxu0 0.0
    %402 = vmatpush1.msra.mxu0 0.0
    %403 = vmatprep.subr.mxu0 0.0
    %404 = vmatpush1.msra.mxu0 0.0
    %405 = vmatprep.mubr.f32.mxu0 0.0
    %406 = vmatmul.mubr.f32.gmra.mrb[0].mxu0 %v339
    %v407 = vpop.f32.mrb[0].mxu0
    %v408 = vadd.f32 0.0, %v407
    %v409 = vpop.f32.mrb[0].mxu0
    %410 = vdwg.mxu0
    %v411 = vadd.f32 %v296, %v408
    %v412 = vxor.u32 %v411, 2147483648
    %v413 = vmul.f32 %v412, 1.442695
    %v414 = vpow.pop %v413
    %v415 = vadd.f32 %v414, 1.0
    %v416 = vrcp.pop %v415
    %v417 = vmul.f32 1.0, %v416
    %419 = vrot.lane.b32.xlu0 %v337, 64
    %v420 = vpop.permute.xlu0 %419
    %v422 = vadd.f32 %v408, %v420
    %424 = vrot.lane.b32.xlu0 %v422, 64
    %v425 = vpop.permute.xlu0 %424
    %v427 = vmul.f32 %v417, %v425
    %429 = vrot.lane.b32.xlu0 %v427, 64
    %v430 = vpop.permute.xlu0 %429
    %v432 = vadd.f32 %v296, %v430
    %v433 = vtanh.pop %v432
    %v434 = vsub.f32 1.0, %v417
    %436 = vrot.lane.b32.xlu0 %v433, 96
    %v437 = vpop.permute.xlu0 %436
    %v439 = vmul.f32 %v434, %v437
    %440 = vrot.lane.b32.xlu0 %v58, 32
    %v441 = vpop.permute.xlu0 %440
    %v443 = vmul.f32 %v417, %v441
    %v444 = vadd.f32 %v439, %v443
    %446 = vrot.lane.b32.xlu0 %v444, 96
    %v447 = vpop.permute.xlu0 %446
    %449 = vst.msk [vmem:[#allocation2] sm:$0xff] %vm63, %v447
    %v450 = vsel %vm63, %v447, 0
    %452 = vmatprep.subr.mxu0 0.0
    %453 = vmatpush1.msra.mxu0 %v33
    %454 = vmatprep.subr.mxu0 0.0
    %455 = vmatpush1.msra.mxu0 %v34
    %456 = vmatprep.subr.mxu0 0.0
    %457 = vmatpush1.msra.mxu0 %v35
    %458 = vmatprep.subr.mxu0 0.0
    %459 = vmatpush1.msra.mxu0 %v36
    %460 = vmatprep.subr.mxu0 0.0
    %461 = vmatpush1.msra.mxu0 0.0
    %462 = vmatprep.subr.mxu0 0.0
    %463 = vmatpush1.msra.mxu0 0.0
    %464 = vmatprep.subr.mxu0 0.0
    %465 = vmatpush1.msra.mxu0 0.0
    %466 = vmatprep.subr.mxu0 0.0
    %467 = vmatpush1.msra.mxu0 0.0
    %468 = vmatprep.subr.mxu0 0.0
    %469 = vmatpush1.msra.mxu0 0.0
    %470 = vmatprep.subr.mxu0 0.0
    %471 = vmatpush1.msra.mxu0 0.0
    %472 = vmatprep.subr.mxu0 0.0
    %473 = vmatpush1.msra.mxu0 0.0
    %474 = vmatprep.subr.mxu0 0.0
    %475 = vmatpush1.msra.mxu0 0.0
    %476 = vmatprep.subr.mxu0 0.0
    %477 = vmatpush1.msra.mxu0 0.0
    %478 = vmatprep.subr.mxu0 0.0
    %479 = vmatpush1.msra.mxu0 0.0
    %480 = vmatprep.subr.mxu0 0.0
    %481 = vmatpush1.msra.mxu0 0.0
    %482 = vmatprep.subr.mxu0 0.0
    %483 = vmatpush1.msra.mxu0 0.0
    %484 = vmatprep.subr.mxu0 0.0
    %485 = vmatpush1.msra.mxu0 0.0
    %486 = vmatprep.subr.mxu0 0.0
    %487 = vmatpush1.msra.mxu0 0.0
    %488 = vmatprep.subr.mxu0 0.0
    %489 = vmatpush1.msra.mxu0 0.0
    %490 = vmatprep.subr.mxu0 0.0
    %491 = vmatpush1.msra.mxu0 0.0
    %492 = vmatprep.subr.mxu0 0.0
    %493 = vmatpush1.msra.mxu0 0.0
    %494 = vmatprep.subr.mxu0 0.0
    %495 = vmatpush1.msra.mxu0 0.0
    %496 = vmatprep.subr.mxu0 0.0
    %497 = vmatpush1.msra.mxu0 0.0
    %498 = vmatprep.subr.mxu0 0.0
    %499 = vmatpush1.msra.mxu0 0.0
    %500 = vmatprep.subr.mxu0 0.0
    %501 = vmatpush1.msra.mxu0 0.0
    %502 = vmatprep.subr.mxu0 0.0
    %503 = vmatpush1.msra.mxu0 0.0
    %504 = vmatprep.subr.mxu0 0.0
    %505 = vmatpush1.msra.mxu0 0.0
    %506 = vmatprep.subr.mxu0 0.0
    %507 = vmatpush1.msra.mxu0 0.0
    %508 = vmatprep.subr.mxu0 0.0
    %509 = vmatpush1.msra.mxu0 0.0
    %510 = vmatprep.subr.mxu0 0.0
    %511 = vmatpush1.msra.mxu0 0.0
    %512 = vmatprep.subr.mxu0 0.0
    %513 = vmatpush1.msra.mxu0 0.0
    %514 = vmatprep.subr.mxu0 0.0
    %515 = vmatpush1.msra.mxu0 0.0
    %516 = vmatprep.mubr.f32.mxu0 0.0
    %517 = vmatmul.mubr.f32.gmra.mrb[0].mxu0 %v450
    %v518 = vpop.f32.mrb[0].mxu0
    %v519 = vadd.f32 0.0, %v518
    %v520 = vpop.f32.mrb[0].mxu0
    %521 = vdwg.mxu0
    %v522 = vadd.f32 %v301, %v519
    %v523 = vxor.u32 %v522, 2147483648
    %v524 = vmul.f32 %v523, 1.442695
    %v525 = vpow.pop %v524
    %v526 = vadd.f32 %v525, 1.0
    %v527 = vrcp.pop %v526
    %v528 = vmul.f32 1.0, %v527
    %v529 = vadd.f32 %v519, %v420
    %531 = vrot.lane.b32.xlu0 %v529, 64
    %v532 = vpop.permute.xlu0 %531
    %v534 = vmul.f32 %v528, %v532
    %536 = vrot.lane.b32.xlu0 %v534, 64
    %v537 = vpop.permute.xlu0 %536
    %v539 = vadd.f32 %v301, %v537
    %v540 = vtanh.pop %v539
    %v541 = vsub.f32 1.0, %v528
    %543 = vrot.lane.b32.xlu0 %v540, 96
    %v544 = vpop.permute.xlu0 %543
    %v546 = vmul.f32 %v541, %v544
    %v547 = vmul.f32 %v528, %v444
    %v548 = vadd.f32 %v546, %v547
    %550 = vrot.lane.b32.xlu0 %v548, 96
    %v551 = vpop.permute.xlu0 %550
    %553 = vst.msk [vmem:[#allocation2 + $0x8] sm:$0xff] %vm63, %v551
    %v554 = vsel %vm63, %v551, 0
    %556 = vmatprep.subr.mxu0 0.0
    %557 = vmatpush1.msra.mxu0 %v33
    %558 = vmatprep.subr.mxu0 0.0
    %559 = vmatpush1.msra.mxu0 %v34
    %560 = vmatprep.subr.mxu0 0.0
    %561 = vmatpush1.msra.mxu0 %v35
    %562 = vmatprep.subr.mxu0 0.0
    %563 = vmatpush1.msra.mxu0 %v36
    %564 = vmatprep.subr.mxu0 0.0
    %565 = vmatpush1.msra.mxu0 0.0
    %566 = vmatprep.subr.mxu0 0.0
    %567 = vmatpush1.msra.mxu0 0.0
    %568 = vmatprep.subr.mxu0 0.0
    %569 = vmatpush1.msra.mxu0 0.0
    %570 = vmatprep.subr.mxu0 0.0
    %571 = vmatpush1.msra.mxu0 0.0
    %572 = vmatprep.subr.mxu0 0.0
    %573 = vmatpush1.msra.mxu0 0.0
    %574 = vmatprep.subr.mxu0 0.0
    %575 = vmatpush1.msra.mxu0 0.0
    %576 = vmatprep.subr.mxu0 0.0
    %577 = vmatpush1.msra.mxu0 0.0
    %578 = vmatprep.subr.mxu0 0.0
    %579 = vmatpush1.msra.mxu0 0.0
    %580 = vmatprep.subr.mxu0 0.0
    %581 = vmatpush1.msra.mxu0 0.0
    %582 = vmatprep.subr.mxu0 0.0
    %583 = vmatpush1.msra.mxu0 0.0
    %584 = vmatprep.subr.mxu0 0.0
    %585 = vmatpush1.msra.mxu0 0.0
    %586 = vmatprep.subr.mxu0 0.0
    %587 = vmatpush1.msra.mxu0 0.0
    %588 = vmatprep.subr.mxu0 0.0
    %589 = vmatpush1.msra.mxu0 0.0
    %590 = vmatprep.subr.mxu0 0.0
    %591 = vmatpush1.msra.mxu0 0.0
    %592 = vmatprep.subr.mxu0 0.0
    %593 = vmatpush1.msra.mxu0 0.0
    %594 = vmatprep.subr.mxu0 0.0
    %595 = vmatpush1.msra.mxu0 0.0
    %596 = vmatprep.subr.mxu0 0.0
    %597 = vmatpush1.msra.mxu0 0.0
    %598 = vmatprep.subr.mxu0 0.0
    %599 = vmatpush1.msra.mxu0 0.0
    %600 = vmatprep.subr.mxu0 0.0
    %601 = vmatpush1.msra.mxu0 0.0
    %602 = vmatprep.subr.mxu0 0.0
    %603 = vmatpush1.msra.mxu0 0.0
    %604 = vmatprep.subr.mxu0 0.0
    %605 = vmatpush1.msra.mxu0 0.0
    %606 = vmatprep.subr.mxu0 0.0
    %607 = vmatpush1.msra.mxu0 0.0
    %608 = vmatprep.subr.mxu0 0.0
    %609 = vmatpush1.msra.mxu0 0.0
    %610 = vmatprep.subr.mxu0 0.0
    %611 = vmatpush1.msra.mxu0 0.0
    %612 = vmatprep.subr.mxu0 0.0
    %613 = vmatpush1.msra.mxu0 0.0
    %614 = vmatprep.subr.mxu0 0.0
    %615 = vmatpush1.msra.mxu0 0.0
    %616 = vmatprep.subr.mxu0 0.0
    %617 = vmatpush1.msra.mxu0 0.0
    %618 = vmatprep.subr.mxu0 0.0
    %619 = vmatpush1.msra.mxu0 0.0
    %620 = vmatprep.mubr.f32.mxu0 0.0
    %621 = vmatmul.mubr.f32.gmra.mrb[0].mxu0 %v554
    %v622 = vpop.f32.mrb[0].mxu0
    %v623 = vadd.f32 0.0, %v622
    %v624 = vpop.f32.mrb[0].mxu0
    %625 = vdwg.mxu0
    %v626 = vadd.f32 %v306, %v623
    %v627 = vxor.u32 %v626, 2147483648
    %v628 = vmul.f32 %v627, 1.442695
    %v629 = vpow.pop %v628
    %v630 = vadd.f32 %v629, 1.0
    %v631 = vrcp.pop %v630
    %v632 = vmul.f32 1.0, %v631
    %v633 = vadd.f32 %v623, %v420
    %635 = vrot.lane.b32.xlu0 %v633, 64
    %v636 = vpop.permute.xlu0 %635
    %v638 = vmul.f32 %v632, %v636
    %640 = vrot.lane.b32.xlu0 %v638, 64
    %v641 = vpop.permute.xlu0 %640
    %v643 = vadd.f32 %v306, %v641
    %v644 = vtanh.pop %v643
    %v645 = vsub.f32 1.0, %v632
    %647 = vrot.lane.b32.xlu0 %v644, 96
    %v648 = vpop.permute.xlu0 %647
    %v650 = vmul.f32 %v645, %v648
    %v651 = vmul.f32 %v632, %v548
    %v652 = vadd.f32 %v650, %v651
    %654 = vrot.lane.b32.xlu0 %v652, 96
    %v655 = vpop.permute.xlu0 %654
    %657 = vst.msk [vmem:[#allocation2 + $0x10] sm:$0xff] %vm63, %v655
    %v658 = vsel %vm63, %v655, 0
    %660 = vmatprep.subr.mxu0 0.0
    %661 = vmatpush1.msra.mxu0 %v33
    %662 = vmatprep.subr.mxu0 0.0
    %663 = vmatpush1.msra.mxu0 %v34
    %664 = vmatprep.subr.mxu0 0.0
    %665 = vmatpush1.msra.mxu0 %v35
    %666 = vmatprep.subr.mxu0 0.0
    %667 = vmatpush1.msra.mxu0 %v36
    %668 = vmatprep.subr.mxu0 0.0
    %669 = vmatpush1.msra.mxu0 0.0
    %670 = vmatprep.subr.mxu0 0.0
    %671 = vmatpush1.msra.mxu0 0.0
    %672 = vmatprep.subr.mxu0 0.0
    %673 = vmatpush1.msra.mxu0 0.0
    %674 = vmatprep.subr.mxu0 0.0
    %675 = vmatpush1.msra.mxu0 0.0
    %676 = vmatprep.subr.mxu0 0.0
    %677 = vmatpush1.msra.mxu0 0.0
    %678 = vmatprep.subr.mxu0 0.0
    %679 = vmatpush1.msra.mxu0 0.0
    %680 = vmatprep.subr.mxu0 0.0
    %681 = vmatpush1.msra.mxu0 0.0
    %682 = vmatprep.subr.mxu0 0.0
    %683 = vmatpush1.msra.mxu0 0.0
    %684 = vmatprep.subr.mxu0 0.0
    %685 = vmatpush1.msra.mxu0 0.0
    %686 = vmatprep.subr.mxu0 0.0
    %687 = vmatpush1.msra.mxu0 0.0
    %688 = vmatprep.subr.mxu0 0.0
    %689 = vmatpush1.msra.mxu0 0.0
    %690 = vmatprep.subr.mxu0 0.0
    %691 = vmatpush1.msra.mxu0 0.0
    %692 = vmatprep.subr.mxu0 0.0
    %693 = vmatpush1.msra.mxu0 0.0
    %694 = vmatprep.subr.mxu0 0.0
    %695 = vmatpush1.msra.mxu0 0.0
    %696 = vmatprep.subr.mxu0 0.0
    %697 = vmatpush1.msra.mxu0 0.0
    %698 = vmatprep.subr.mxu0 0.0
    %699 = vmatpush1.msra.mxu0 0.0
    %700 = vmatprep.subr.mxu0 0.0
    %701 = vmatpush1.msra.mxu0 0.0
    %702 = vmatprep.subr.mxu0 0.0
    %703 = vmatpush1.msra.mxu0 0.0
    %704 = vmatprep.subr.mxu0 0.0
    %705 = vmatpush1.msra.mxu0 0.0
    %706 = vmatprep.subr.mxu0 0.0
    %707 = vmatpush1.msra.mxu0 0.0
    %708 = vmatprep.subr.mxu0 0.0
    %709 = vmatpush1.msra.mxu0 0.0
    %710 = vmatprep.subr.mxu0 0.0
    %711 = vmatpush1.msra.mxu0 0.0
    %712 = vmatprep.subr.mxu0 0.0
    %713 = vmatpush1.msra.mxu0 0.0
    %714 = vmatprep.subr.mxu0 0.0
    %715 = vmatpush1.msra.mxu0 0.0
    %716 = vmatprep.subr.mxu0 0.0
    %717 = vmatpush1.msra.mxu0 0.0
    %718 = vmatprep.subr.mxu0 0.0
    %719 = vmatpush1.msra.mxu0 0.0
    %720 = vmatprep.subr.mxu0 0.0
    %721 = vmatpush1.msra.mxu0 0.0
    %722 = vmatprep.subr.mxu0 0.0
    %723 = vmatpush1.msra.mxu0 0.0
    %724 = vmatprep.mubr.f32.mxu0 0.0
    %725 = vmatmul.mubr.f32.gmra.mrb[0].mxu0 %v658
    %v726 = vpop.f32.mrb[0].mxu0
    %v727 = vadd.f32 0.0, %v726
    %v728 = vpop.f32.mrb[0].mxu0
    %729 = vdwg.mxu0
    %v730 = vadd.f32 %v311, %v727
    %v731 = vxor.u32 %v730, 2147483648
    %v732 = vmul.f32 %v731, 1.442695
    %v733 = vpow.pop %v732
    %v734 = vadd.f32 %v733, 1.0
    %v735 = vrcp.pop %v734
    %v736 = vmul.f32 1.0, %v735
    %v737 = vadd.f32 %v727, %v420
    %739 = vrot.lane.b32.xlu0 %v737, 64
    %v740 = vpop.permute.xlu0 %739
    %v742 = vmul.f32 %v736, %v740
    %744 = vrot.lane.b32.xlu0 %v742, 64
    %v745 = vpop.permute.xlu0 %744
    %v747 = vadd.f32 %v311, %v745
    %v748 = vtanh.pop %v747
    %v749 = vsub.f32 1.0, %v736
    %751 = vrot.lane.b32.xlu0 %v748, 96
    %v752 = vpop.permute.xlu0 %751
    %v754 = vmul.f32 %v749, %v752
    %v755 = vmul.f32 %v736, %v652
    %v756 = vadd.f32 %v754, %v755
    %758 = vrot.lane.b32.xlu0 %v756, 96
    %v759 = vpop.permute.xlu0 %758
    %761 = vst.msk [vmem:[#allocation2 + $0x18] sm:$0xff] %vm63, %v759
    %v762 = vsel %vm63, %v759, 0
    %764 = vmatprep.subr.mxu0 0.0
    %765 = vmatpush1.msra.mxu0 %v33
    %766 = vmatprep.subr.mxu0 0.0
    %767 = vmatpush1.msra.mxu0 %v34
    %768 = vmatprep.subr.mxu0 0.0
    %769 = vmatpush1.msra.mxu0 %v35
    %770 = vmatprep.subr.mxu0 0.0
    %771 = vmatpush1.msra.mxu0 %v36
    %772 = vmatprep.subr.mxu0 0.0
    %773 = vmatpush1.msra.mxu0 0.0
    %774 = vmatprep.subr.mxu0 0.0
    %775 = vmatpush1.msra.mxu0 0.0
    %776 = vmatprep.subr.mxu0 0.0
    %777 = vmatpush1.msra.mxu0 0.0
    %778 = vmatprep.subr.mxu0 0.0
    %779 = vmatpush1.msra.mxu0 0.0
    %780 = vmatprep.subr.mxu0 0.0
    %781 = vmatpush1.msra.mxu0 0.0
    %782 = vmatprep.subr.mxu0 0.0
    %783 = vmatpush1.msra.mxu0 0.0
    %784 = vmatprep.subr.mxu0 0.0
    %785 = vmatpush1.msra.mxu0 0.0
    %786 = vmatprep.subr.mxu0 0.0
    %787 = vmatpush1.msra.mxu0 0.0
    %788 = vmatprep.subr.mxu0 0.0
    %789 = vmatpush1.msra.mxu0 0.0
    %790 = vmatprep.subr.mxu0 0.0
    %791 = vmatpush1.msra.mxu0 0.0
    %792 = vmatprep.subr.mxu0 0.0
    %793 = vmatpush1.msra.mxu0 0.0
    %794 = vmatprep.subr.mxu0 0.0
    %795 = vmatpush1.msra.mxu0 0.0
    %796 = vmatprep.subr.mxu0 0.0
    %797 = vmatpush1.msra.mxu0 0.0
    %798 = vmatprep.subr.mxu0 0.0
    %799 = vmatpush1.msra.mxu0 0.0
    %800 = vmatprep.subr.mxu0 0.0
    %801 = vmatpush1.msra.mxu0 0.0
    %802 = vmatprep.subr.mxu0 0.0
    %803 = vmatpush1.msra.mxu0 0.0
    %804 = vmatprep.subr.mxu0 0.0
    %805 = vmatpush1.msra.mxu0 0.0
    %806 = vmatprep.subr.mxu0 0.0
    %807 = vmatpush1.msra.mxu0 0.0
    %808 = vmatprep.subr.mxu0 0.0
    %809 = vmatpush1.msra.mxu0 0.0
    %810 = vmatprep.subr.mxu0 0.0
    %811 = vmatpush1.msra.mxu0 0.0
    %812 = vmatprep.subr.mxu0 0.0
    %813 = vmatpush1.msra.mxu0 0.0
    %814 = vmatprep.subr.mxu0 0.0
    %815 = vmatpush1.msra.mxu0 0.0
    %816 = vmatprep.subr.mxu0 0.0
    %817 = vmatpush1.msra.mxu0 0.0
    %818 = vmatprep.subr.mxu0 0.0
    %819 = vmatpush1.msra.mxu0 0.0
    %820 = vmatprep.subr.mxu0 0.0
    %821 = vmatpush1.msra.mxu0 0.0
    %822 = vmatprep.subr.mxu0 0.0
    %823 = vmatpush1.msra.mxu0 0.0
    %824 = vmatprep.subr.mxu0 0.0
    %825 = vmatpush1.msra.mxu0 0.0
    %826 = vmatprep.subr.mxu0 0.0
    %827 = vmatpush1.msra.mxu0 0.0
    %828 = vmatprep.mubr.f32.mxu0 0.0
    %829 = vmatmul.mubr.f32.gmra.mrb[0].mxu0 %v762
    %v830 = vpop.f32.mrb[0].mxu0
    %v831 = vadd.f32 0.0, %v830
    %v832 = vpop.f32.mrb[0].mxu0
    %833 = vdwg.mxu0
    %v834 = vadd.f32 %v316, %v831
    %v835 = vxor.u32 %v834, 2147483648
    %v836 = vmul.f32 %v835, 1.442695
    %v837 = vpow.pop %v836
    %v838 = vadd.f32 %v837, 1.0
    %v839 = vrcp.pop %v838
    %v840 = vmul.f32 1.0, %v839
    %v841 = vadd.f32 %v831, %v420
    %843 = vrot.lane.b32.xlu0 %v841, 64
    %v844 = vpop.permute.xlu0 %843
    %v846 = vmul.f32 %v840, %v844
    %848 = vrot.lane.b32.xlu0 %v846, 64
    %v849 = vpop.permute.xlu0 %848
    %v851 = vadd.f32 %v316, %v849
    %v852 = vtanh.pop %v851
    %v853 = vsub.f32 1.0, %v840
    %855 = vrot.lane.b32.xlu0 %v852, 96
    %v856 = vpop.permute.xlu0 %855
    %v858 = vmul.f32 %v853, %v856
    %v859 = vmul.f32 %v840, %v756
    %v860 = vadd.f32 %v858, %v859
    %862 = vrot.lane.b32.xlu0 %v860, 96
    %v863 = vpop.permute.xlu0 %862
    %865 = vst.msk [vmem:[#allocation2 + $0x20] sm:$0xff] %vm63, %v863
    %v866 = vsel %vm63, %v863, 0
    %868 = vmatprep.subr.mxu0 0.0
    %869 = vmatpush1.msra.mxu0 %v33
    %870 = vmatprep.subr.mxu0 0.0
    %871 = vmatpush1.msra.mxu0 %v34
    %872 = vmatprep.subr.mxu0 0.0
    %873 = vmatpush1.msra.mxu0 %v35
    %874 = vmatprep.subr.mxu0 0.0
    %875 = vmatpush1.msra.mxu0 %v36
    %876 = vmatprep.subr.mxu0 0.0
    %877 = vmatpush1.msra.mxu0 0.0
    %878 = vmatprep.subr.mxu0 0.0
    %879 = vmatpush1.msra.mxu0 0.0
    %880 = vmatprep.subr.mxu0 0.0
    %881 = vmatpush1.msra.mxu0 0.0
    %882 = vmatprep.subr.mxu0 0.0
    %883 = vmatpush1.msra.mxu0 0.0
    %884 = vmatprep.subr.mxu0 0.0
    %885 = vmatpush1.msra.mxu0 0.0
    %886 = vmatprep.subr.mxu0 0.0
    %887 = vmatpush1.msra.mxu0 0.0
    %888 = vmatprep.subr.mxu0 0.0
    %889 = vmatpush1.msra.mxu0 0.0
    %890 = vmatprep.subr.mxu0 0.0
    %891 = vmatpush1.msra.mxu0 0.0
    %892 = vmatprep.subr.mxu0 0.0
    %893 = vmatpush1.msra.mxu0 0.0
    %894 = vmatprep.subr.mxu0 0.0
    %895 = vmatpush1.msra.mxu0 0.0
    %896 = vmatprep.subr.mxu0 0.0
    %897 = vmatpush1.msra.mxu0 0.0
    %898 = vmatprep.subr.mxu0 0.0
    %899 = vmatpush1.msra.mxu0 0.0
    %900 = vmatprep.subr.mxu0 0.0
    %901 = vmatpush1.msra.mxu0 0.0
    %902 = vmatprep.subr.mxu0 0.0
    %903 = vmatpush1.msra.mxu0 0.0
    %904 = vmatprep.subr.mxu0 0.0
    %905 = vmatpush1.msra.mxu0 0.0
    %906 = vmatprep.subr.mxu0 0.0
    %907 = vmatpush1.msra.mxu0 0.0
    %908 = vmatprep.subr.mxu0 0.0
    %909 = vmatpush1.msra.mxu0 0.0
    %910 = vmatprep.subr.mxu0 0.0
    %911 = vmatpush1.msra.mxu0 0.0
    %912 = vmatprep.subr.mxu0 0.0
    %913 = vmatpush1.msra.mxu0 0.0
    %914 = vmatprep.subr.mxu0 0.0
    %915 = vmatpush1.msra.mxu0 0.0
    %916 = vmatprep.subr.mxu0 0.0
    %917 = vmatpush1.msra.mxu0 0.0
    %918 = vmatprep.subr.mxu0 0.0
    %919 = vmatpush1.msra.mxu0 0.0
    %920 = vmatprep.subr.mxu0 0.0
    %921 = vmatpush1.msra.mxu0 0.0
    %922 = vmatprep.subr.mxu0 0.0
    %923 = vmatpush1.msra.mxu0 0.0
    %924 = vmatprep.subr.mxu0 0.0
    %925 = vmatpush1.msra.mxu0 0.0
    %926 = vmatprep.subr.mxu0 0.0
    %927 = vmatpush1.msra.mxu0 0.0
    %928 = vmatprep.subr.mxu0 0.0
    %929 = vmatpush1.msra.mxu0 0.0
    %930 = vmatprep.subr.mxu0 0.0
    %931 = vmatpush1.msra.mxu0 0.0
    %932 = vmatprep.mubr.f32.mxu0 0.0
    %933 = vmatmul.mubr.f32.gmra.mrb[0].mxu0 %v866
    %v934 = vpop.f32.mrb[0].mxu0
    %v935 = vadd.f32 0.0, %v934
    %v936 = vpop.f32.mrb[0].mxu0
    %937 = vdwg.mxu0
    %v938 = vadd.f32 %v321, %v935
    %v939 = vxor.u32 %v938, 2147483648
    %v940 = vmul.f32 %v939, 1.442695
    %v941 = vpow.pop %v940
    %v942 = vadd.f32 %v941, 1.0
    %v943 = vrcp.pop %v942
    %v944 = vmul.f32 1.0, %v943
    %v945 = vadd.f32 %v935, %v420
    %947 = vrot.lane.b32.xlu0 %v945, 64
    %v948 = vpop.permute.xlu0 %947
    %v950 = vmul.f32 %v944, %v948
    %952 = vrot.lane.b32.xlu0 %v950, 64
    %v953 = vpop.permute.xlu0 %952
    %v955 = vadd.f32 %v321, %v953
    %v956 = vtanh.pop %v955
    %v957 = vsub.f32 1.0, %v944
    %959 = vrot.lane.b32.xlu0 %v956, 96
    %v960 = vpop.permute.xlu0 %959
    %v962 = vmul.f32 %v957, %v960
    %v963 = vmul.f32 %v944, %v860
    %v964 = vadd.f32 %v962, %v963
    %966 = vrot.lane.b32.xlu0 %v964, 96
    %v967 = vpop.permute.xlu0 %966
    %969 = vst.msk [vmem:[#allocation2 + $0x28] sm:$0xff] %vm63, %v967
    %v970 = vsel %vm63, %v967, 0
    %972 = vmatprep.subr.mxu0 0.0
    %973 = vmatpush1.msra.mxu0 %v33
    %974 = vmatprep.subr.mxu0 0.0
    %975 = vmatpush1.msra.mxu0 %v34
    %976 = vmatprep.subr.mxu0 0.0
    %977 = vmatpush1.msra.mxu0 %v35
    %978 = vmatprep.subr.mxu0 0.0
    %979 = vmatpush1.msra.mxu0 %v36
    %980 = vmatprep.subr.mxu0 0.0
    %981 = vmatpush1.msra.mxu0 0.0
    %982 = vmatprep.subr.mxu0 0.0
    %983 = vmatpush1.msra.mxu0 0.0
    %984 = vmatprep.subr.mxu0 0.0
    %985 = vmatpush1.msra.mxu0 0.0
    %986 = vmatprep.subr.mxu0 0.0
    %987 = vmatpush1.msra.mxu0 0.0
    %988 = vmatprep.subr.mxu0 0.0
    %989 = vmatpush1.msra.mxu0 0.0
    %990 = vmatprep.subr.mxu0 0.0
    %991 = vmatpush1.msra.mxu0 0.0
    %992 = vmatprep.subr.mxu0 0.0
    %993 = vmatpush1.msra.mxu0 0.0
    %994 = vmatprep.subr.mxu0 0.0
    %995 = vmatpush1.msra.mxu0 0.0
    %996 = vmatprep.subr.mxu0 0.0
    %997 = vmatpush1.msra.mxu0 0.0
    %998 = vmatprep.subr.mxu0 0.0
    %999 = vmatpush1.msra.mxu0 0.0
    %1000 = vmatprep.subr.mxu0 0.0
    %1001 = vmatpush1.msra.mxu0 0.0
    %1002 = vmatprep.subr.mxu0 0.0
    %1003 = vmatpush1.msra.mxu0 0.0
    %1004 = vmatprep.subr.mxu0 0.0
    %1005 = vmatpush1.msra.mxu0 0.0
    %1006 = vmatprep.subr.mxu0 0.0
    %1007 = vmatpush1.msra.mxu0 0.0
    %1008 = vmatprep.subr.mxu0 0.0
    %1009 = vmatpush1.msra.mxu0 0.0
    %1010 = vmatprep.subr.mxu0 0.0
    %1011 = vmatpush1.msra.mxu0 0.0
    %1012 = vmatprep.subr.mxu0 0.0
    %1013 = vmatpush1.msra.mxu0 0.0
    %1014 = vmatprep.subr.mxu0 0.0
    %1015 = vmatpush1.msra.mxu0 0.0
    %1016 = vmatprep.subr.mxu0 0.0
    %1017 = vmatpush1.msra.mxu0 0.0
    %1018 = vmatprep.subr.mxu0 0.0
    %1019 = vmatpush1.msra.mxu0 0.0
    %1020 = vmatprep.subr.mxu0 0.0
    %1021 = vmatpush1.msra.mxu0 0.0
    %1022 = vmatprep.subr.mxu0 0.0
    %1023 = vmatpush1.msra.mxu0 0.0
    %1024 = vmatprep.subr.mxu0 0.0
    %1025 = vmatpush1.msra.mxu0 0.0
    %1026 = vmatprep.subr.mxu0 0.0
    %1027 = vmatpush1.msra.mxu0 0.0
    %1028 = vmatprep.subr.mxu0 0.0
    %1029 = vmatpush1.msra.mxu0 0.0
    %1030 = vmatprep.subr.mxu0 0.0
    %1031 = vmatpush1.msra.mxu0 0.0
    %1032 = vmatprep.subr.mxu0 0.0
    %1033 = vmatpush1.msra.mxu0 0.0
    %1034 = vmatprep.subr.mxu0 0.0
    %1035 = vmatpush1.msra.mxu0 0.0
    %1036 = vmatprep.mubr.f32.mxu0 0.0
    %1037 = vmatmul.mubr.f32.gmra.mrb[0].mxu0 %v970
    %v1038 = vpop.f32.mrb[0].mxu0
    %v1039 = vadd.f32 0.0, %v1038
    %v1040 = vpop.f32.mrb[0].mxu0
    %1041 = vdwg.mxu0
    %v1042 = vadd.f32 %v326, %v1039
    %v1043 = vxor.u32 %v1042, 2147483648
    %v1044 = vmul.f32 %v1043, 1.442695
    %v1045 = vpow.pop %v1044
    %v1046 = vadd.f32 %v1045, 1.0
    %v1047 = vrcp.pop %v1046
    %v1048 = vmul.f32 1.0, %v1047
    %v1049 = vadd.f32 %v1039, %v420
    %1051 = vrot.lane.b32.xlu0 %v1049, 64
    %v1052 = vpop.permute.xlu0 %1051
    %v1054 = vmul.f32 %v1048, %v1052
    %1056 = vrot.lane.b32.xlu0 %v1054, 64
    %v1057 = vpop.permute.xlu0 %1056
    %v1059 = vadd.f32 %v326, %v1057
    %v1060 = vtanh.pop %v1059
    %v1061 = vsub.f32 1.0, %v1048
    %1063 = vrot.lane.b32.xlu0 %v1060, 96
    %v1064 = vpop.permute.xlu0 %1063
    %v1066 = vmul.f32 %v1061, %v1064
    %v1067 = vmul.f32 %v1048, %v964
    %v1068 = vadd.f32 %v1066, %v1067
    %1070 = vrot.lane.b32.xlu0 %v1068, 96
    %v1071 = vpop.permute.xlu0 %1070
    %1073 = vst.msk [vmem:[#allocation2 + $0x30] sm:$0xff] %vm63, %v1071
    %v1074 = vsel %vm63, %v1071, 0
    %1076 = vmatprep.subr.mxu0 0.0
    %1077 = vmatpush1.msra.mxu0 %v33
    %1078 = vmatprep.subr.mxu0 0.0
    %1079 = vmatpush1.msra.mxu0 %v34
    %1080 = vmatprep.subr.mxu0 0.0
    %1081 = vmatpush1.msra.mxu0 %v35
    %1082 = vmatprep.subr.mxu0 0.0
    %1083 = vmatpush1.msra.mxu0 %v36
    %1084 = vmatprep.subr.mxu0 0.0
    %1085 = vmatpush1.msra.mxu0 0.0
    %1086 = vmatprep.subr.mxu0 0.0
    %1087 = vmatpush1.msra.mxu0 0.0
    %1088 = vmatprep.subr.mxu0 0.0
    %1089 = vmatpush1.msra.mxu0 0.0
    %1090 = vmatprep.subr.mxu0 0.0
    %1091 = vmatpush1.msra.mxu0 0.0
    %1092 = vmatprep.subr.mxu0 0.0
    %1093 = vmatpush1.msra.mxu0 0.0
    %1094 = vmatprep.subr.mxu0 0.0
    %1095 = vmatpush1.msra.mxu0 0.0
    %1096 = vmatprep.subr.mxu0 0.0
    %1097 = vmatpush1.msra.mxu0 0.0
    %1098 = vmatprep.subr.mxu0 0.0
    %1099 = vmatpush1.msra.mxu0 0.0
    %1100 = vmatprep.subr.mxu0 0.0
    %1101 = vmatpush1.msra.mxu0 0.0
    %1102 = vmatprep.subr.mxu0 0.0
    %1103 = vmatpush1.msra.mxu0 0.0
    %1104 = vmatprep.subr.mxu0 0.0
    %1105 = vmatpush1.msra.mxu0 0.0
    %1106 = vmatprep.subr.mxu0 0.0
    %1107 = vmatpush1.msra.mxu0 0.0
    %1108 = vmatprep.subr.mxu0 0.0
    %1109 = vmatpush1.msra.mxu0 0.0
    %1110 = vmatprep.subr.mxu0 0.0
    %1111 = vmatpush1.msra.mxu0 0.0
    %1112 = vmatprep.subr.mxu0 0.0
    %1113 = vmatpush1.msra.mxu0 0.0
    %1114 = vmatprep.subr.mxu0 0.0
    %1115 = vmatpush1.msra.mxu0 0.0
    %1116 = vmatprep.subr.mxu0 0.0
    %1117 = vmatpush1.msra.mxu0 0.0
    %1118 = vmatprep.subr.mxu0 0.0
    %1119 = vmatpush1.msra.mxu0 0.0
    %1120 = vmatprep.subr.mxu0 0.0
    %1121 = vmatpush1.msra.mxu0 0.0
    %1122 = vmatprep.subr.mxu0 0.0
    %1123 = vmatpush1.msra.mxu0 0.0
    %1124 = vmatprep.subr.mxu0 0.0
    %1125 = vmatpush1.msra.mxu0 0.0
    %1126 = vmatprep.subr.mxu0 0.0
    %1127 = vmatpush1.msra.mxu0 0.0
    %1128 = vmatprep.subr.mxu0 0.0
    %1129 = vmatpush1.msra.mxu0 0.0
    %1130 = vmatprep.subr.mxu0 0.0
    %1131 = vmatpush1.msra.mxu0 0.0
    %1132 = vmatprep.subr.mxu0 0.0
    %1133 = vmatpush1.msra.mxu0 0.0
    %1134 = vmatprep.subr.mxu0 0.0
    %1135 = vmatpush1.msra.mxu0 0.0
    %1136 = vmatprep.subr.mxu0 0.0
    %1137 = vmatpush1.msra.mxu0 0.0
    %1138 = vmatprep.subr.mxu0 0.0
    %1139 = vmatpush1.msra.mxu0 0.0
    %1140 = vmatprep.mubr.f32.mxu0 0.0
    %1141 = vmatmul.mubr.f32.gmra.mrb[0].mxu0 %v1074
    %v1142 = vpop.f32.mrb[0].mxu0
    %v1143 = vadd.f32 0.0, %v1142
    %v1144 = vpop.f32.mrb[0].mxu0
    %1145 = vdwg.mxu0
    %v1146 = vadd.f32 %v331, %v1143
    %v1147 = vxor.u32 %v1146, 2147483648
    %v1148 = vmul.f32 %v1147, 1.442695
    %v1149 = vpow.pop %v1148
    %v1150 = vadd.f32 %v1149, 1.0
    %v1151 = vrcp.pop %v1150
    %v1152 = vmul.f32 1.0, %v1151
    %v1153 = vadd.f32 %v1143, %v420
    %1155 = vrot.lane.b32.xlu0 %v1153, 64
    %v1156 = vpop.permute.xlu0 %1155
    %v1158 = vmul.f32 %v1152, %v1156
    %1160 = vrot.lane.b32.xlu0 %v1158, 64
    %v1161 = vpop.permute.xlu0 %1160
    %v1163 = vadd.f32 %v331, %v1161
    %v1164 = vtanh.pop %v1163
    %v1165 = vsub.f32 1.0, %v1152
    %1167 = vrot.lane.b32.xlu0 %v1164, 96
    %v1168 = vpop.permute.xlu0 %1167
    %v1170 = vmul.f32 %v1165, %v1168
    %v1171 = vmul.f32 %v1152, %v1068
    %v1172 = vadd.f32 %v1170, %v1171
    %1174 = vrot.lane.b32.xlu0 %v1172, 96
    %v1175 = vpop.permute.xlu0 %1174
    %1177 = vst.msk [vmem:[#allocation2 + $0x38] sm:$0xff] %vm63, %v1175
    %v1178 = vld [vmem:[#allocation2] sm:$0xff]
    %v1179 = vld [vmem:[#allocation2 + $0x8] sm:$0xff]
    %v1180 = vld [vmem:[#allocation2 + $0x10] sm:$0xff]
    %v1181 = vld [vmem:[#allocation2 + $0x18] sm:$0xff]
    %v1182 = vld [vmem:[#allocation2 + $0x20] sm:$0xff]
    %v1183 = vld [vmem:[#allocation2 + $0x28] sm:$0xff]
    %v1184 = vld [vmem:[#allocation2 + $0x30] sm:$0xff]
    %v1185 = vld [vmem:[#allocation2 + $0x38] sm:$0xff]
    %v1186 = vlaneseq
    %v1187 = vshrl.u32 %v1186, 7
    %v1188 = vsub.s32 0, %v1187
    %v1189 = vrot.slane %v48, %v1188
    %v1191 = vsel %vm63, %v1178, 0
    %v1194 = vsel %vm63, %v1179, 0
    %v1197 = vsel %vm63, %v1180, 0
    %v1200 = vsel %vm63, %v1181, 0
    %v1203 = vsel %vm63, %v1182, 0
    %v1206 = vsel %vm63, %v1183, 0
    %v1209 = vsel %vm63, %v1184, 0
    %v1212 = vsel %vm63, %v1185, 0
    %1214 = vmatprep.subr.mxu0 0.0
    %1215 = vmatpush1.msra.mxu0 %v37
    %1216 = vmatprep.subr.mxu0 0.0
    %1217 = vmatpush1.msra.mxu0 %v38
    %1218 = vmatprep.subr.mxu0 0.0
    %1219 = vmatpush1.msra.mxu0 %v39
    %1220 = vmatprep.subr.mxu0 0.0
    %1221 = vmatpush1.msra.mxu0 %v40
    %1222 = vmatprep.subr.mxu0 0.0
    %1223 = vmatpush1.msra.mxu0 0.0
    %1224 = vmatprep.subr.mxu0 0.0
    %1225 = vmatpush1.msra.mxu0 0.0
    %1226 = vmatprep.subr.mxu0 0.0
    %1227 = vmatpush1.msra.mxu0 0.0
    %1228 = vmatprep.subr.mxu0 0.0
    %1229 = vmatpush1.msra.mxu0 0.0
    %1230 = vmatprep.subr.mxu0 0.0
    %1231 = vmatpush1.msra.mxu0 0.0
    %1232 = vmatprep.subr.mxu0 0.0
    %1233 = vmatpush1.msra.mxu0 0.0
    %1234 = vmatprep.subr.mxu0 0.0
    %1235 = vmatpush1.msra.mxu0 0.0
    %1236 = vmatprep.subr.mxu0 0.0
    %1237 = vmatpush1.msra.mxu0 0.0
    %1238 = vmatprep.subr.mxu0 0.0
    %1239 = vmatpush1.msra.mxu0 0.0
    %1240 = vmatprep.subr.mxu0 0.0
    %1241 = vmatpush1.msra.mxu0 0.0
    %1242 = vmatprep.subr.mxu0 0.0
    %1243 = vmatpush1.msra.mxu0 0.0
    %1244 = vmatprep.subr.mxu0 0.0
    %1245 = vmatpush1.msra.mxu0 0.0
    %1246 = vmatprep.subr.mxu0 0.0
    %1247 = vmatpush1.msra.mxu0 0.0
    %1248 = vmatprep.subr.mxu0 0.0
    %1249 = vmatpush1.msra.mxu0 0.0
    %1250 = vmatprep.subr.mxu0 0.0
    %1251 = vmatpush1.msra.mxu0 0.0
    %1252 = vmatprep.subr.mxu0 0.0
    %1253 = vmatpush1.msra.mxu0 0.0
    %1254 = vmatprep.subr.mxu0 0.0
    %1255 = vmatpush1.msra.mxu0 0.0
    %1256 = vmatprep.subr.mxu0 0.0
    %1257 = vmatpush1.msra.mxu0 0.0
    %1258 = vmatprep.subr.mxu0 0.0
    %1259 = vmatpush1.msra.mxu0 0.0
    %1260 = vmatprep.subr.mxu0 0.0
    %1261 = vmatpush1.msra.mxu0 0.0
    %1262 = vmatprep.subr.mxu0 0.0
    %1263 = vmatpush1.msra.mxu0 0.0
    %1264 = vmatprep.subr.mxu0 0.0
    %1265 = vmatpush1.msra.mxu0 0.0
    %1266 = vmatprep.subr.mxu0 0.0
    %1267 = vmatpush1.msra.mxu0 0.0
    %1268 = vmatprep.subr.mxu0 0.0
    %1269 = vmatpush1.msra.mxu0 0.0
    %1270 = vmatprep.subr.mxu0 0.0
    %1271 = vmatpush1.msra.mxu0 0.0
    %1272 = vmatprep.subr.mxu0 0.0
    %1273 = vmatpush1.msra.mxu0 0.0
    %1274 = vmatprep.subr.mxu0 0.0
    %1275 = vmatpush1.msra.mxu0 0.0
    %1276 = vmatprep.subr.mxu0 0.0
    %1277 = vmatpush1.msra.mxu0 0.0
    %1278 = vmatprep.mubr.f32.mxu0 0.0
    %1279 = vmatmul.mubr.f32.gmra.mrb[0].mxu0 %v1191
    %v1280 = vpop.f32.mrb[0].mxu0
    %v1281 = vadd.f32 %v1189, %v1280
    %v1282 = vpop.f32.mrb[0].mxu0
    %1283 = vmatprep.mubr.f32.mxu0 0.0
    %1284 = vmatmul.mubr.f32.gmra.mrb[0].mxu0 %v1194
    %v1285 = vpop.f32.mrb[0].mxu0
    %v1286 = vadd.f32 %v1189, %v1285
    %v1287 = vpop.f32.mrb[0].mxu0
    %1288 = vmatprep.mubr.f32.mxu0 0.0
    %1289 = vmatmul.mubr.f32.gmra.mrb[0].mxu0 %v1197
    %v1290 = vpop.f32.mrb[0].mxu0
    %v1291 = vadd.f32 %v1189, %v1290
    %v1292 = vpop.f32.mrb[0].mxu0
    %1293 = vmatprep.mubr.f32.mxu0 0.0
    %1294 = vmatmul.mubr.f32.gmra.mrb[0].mxu0 %v1200
    %v1295 = vpop.f32.mrb[0].mxu0
    %v1296 = vadd.f32 %v1189, %v1295
    %v1297 = vpop.f32.mrb[0].mxu0
    %1298 = vmatprep.mubr.f32.mxu0 0.0
    %1299 = vmatmul.mubr.f32.gmra.mrb[0].mxu0 %v1203
    %v1300 = vpop.f32.mrb[0].mxu0
    %v1301 = vadd.f32 %v1189, %v1300
    %v1302 = vpop.f32.mrb[0].mxu0
    %1303 = vmatprep.mubr.f32.mxu0 0.0
    %1304 = vmatmul.mubr.f32.gmra.mrb[0].mxu0 %v1206
    %v1305 = vpop.f32.mrb[0].mxu0
    %v1306 = vadd.f32 %v1189, %v1305
    %v1307 = vpop.f32.mrb[0].mxu0
    %1308 = vmatprep.mubr.f32.mxu0 0.0
    %1309 = vmatmul.mubr.f32.gmra.mrb[0].mxu0 %v1209
    %v1310 = vpop.f32.mrb[0].mxu0
    %v1311 = vadd.f32 %v1189, %v1310
    %v1312 = vpop.f32.mrb[0].mxu0
    %1313 = vmatprep.mubr.f32.mxu0 0.0
    %1314 = vmatmul.mubr.f32.gmra.mrb[0].mxu0 %v1212
    %v1315 = vpop.f32.mrb[0].mxu0
    %v1316 = vadd.f32 %v1189, %v1315
    %v1317 = vpop.f32.mrb[0].mxu0
    %1318 = vdwg.mxu0
    %v1319 = vmax.f32 %v1281, 0.0
    %v1320 = vmax.f32 %v1286, 0.0
    %v1321 = vmax.f32 %v1291, 0.0
    %v1322 = vmax.f32 %v1296, 0.0
    %v1323 = vmax.f32 %v1301, 0.0
    %v1324 = vmax.f32 %v1306, 0.0
    %v1325 = vmax.f32 %v1311, 0.0
    %v1326 = vmax.f32 %v1316, 0.0
    %v1327 = vlaneseq
    %v1328 = vshrl.u32 %v1327, 7
    %v1329 = vsub.s32 0, %v1328
    %v1330 = vrot.slane %v49, %v1329
    %v1332 = vsel %vm63, %v1319, 0
    %v1335 = vsel %vm63, %v1320, 0
    %v1338 = vsel %vm63, %v1321, 0
    %v1341 = vsel %vm63, %v1322, 0
    %v1344 = vsel %vm63, %v1323, 0
    %v1347 = vsel %vm63, %v1324, 0
    %v1350 = vsel %vm63, %v1325, 0
    %v1353 = vsel %vm63, %v1326, 0
    %1355 = vmatprep.subr.mxu0 0.0
    %1356 = vmatpush1.msra.mxu0 %v41
    %1357 = vmatprep.subr.mxu0 0.0
    %1358 = vmatpush1.msra.mxu0 %v42
    %1359 = vmatprep.subr.mxu0 0.0
    %1360 = vmatpush1.msra.mxu0 %v43
    %1361 = vmatprep.subr.mxu0 0.0
    %1362 = vmatpush1.msra.mxu0 %v44
    %1363 = vmatprep.subr.mxu0 0.0
    %1364 = vmatpush1.msra.mxu0 0.0
    %1365 = vmatprep.subr.mxu0 0.0
    %1366 = vmatpush1.msra.mxu0 0.0
    %1367 = vmatprep.subr.mxu0 0.0
    %1368 = vmatpush1.msra.mxu0 0.0
    %1369 = vmatprep.subr.mxu0 0.0
    %1370 = vmatpush1.msra.mxu0 0.0
    %1371 = vmatprep.subr.mxu0 0.0
    %1372 = vmatpush1.msra.mxu0 0.0
    %1373 = vmatprep.subr.mxu0 0.0
    %1374 = vmatpush1.msra.mxu0 0.0
    %1375 = vmatprep.subr.mxu0 0.0
    %1376 = vmatpush1.msra.mxu0 0.0
    %1377 = vmatprep.subr.mxu0 0.0
    %1378 = vmatpush1.msra.mxu0 0.0
    %1379 = vmatprep.subr.mxu0 0.0
    %1380 = vmatpush1.msra.mxu0 0.0
    %1381 = vmatprep.subr.mxu0 0.0
    %1382 = vmatpush1.msra.mxu0 0.0
    %1383 = vmatprep.subr.mxu0 0.0
    %1384 = vmatpush1.msra.mxu0 0.0
    %1385 = vmatprep.subr.mxu0 0.0
    %1386 = vmatpush1.msra.mxu0 0.0
    %1387 = vmatprep.subr.mxu0 0.0
    %1388 = vmatpush1.msra.mxu0 0.0
    %1389 = vmatprep.subr.mxu0 0.0
    %1390 = vmatpush1.msra.mxu0 0.0
    %1391 = vmatprep.subr.mxu0 0.0
    %1392 = vmatpush1.msra.mxu0 0.0
    %1393 = vmatprep.subr.mxu0 0.0
    %1394 = vmatpush1.msra.mxu0 0.0
    %1395 = vmatprep.subr.mxu0 0.0
    %1396 = vmatpush1.msra.mxu0 0.0
    %1397 = vmatprep.subr.mxu0 0.0
    %1398 = vmatpush1.msra.mxu0 0.0
    %1399 = vmatprep.subr.mxu0 0.0
    %1400 = vmatpush1.msra.mxu0 0.0
    %1401 = vmatprep.subr.mxu0 0.0
    %1402 = vmatpush1.msra.mxu0 0.0
    %1403 = vmatprep.subr.mxu0 0.0
    %1404 = vmatpush1.msra.mxu0 0.0
    %1405 = vmatprep.subr.mxu0 0.0
    %1406 = vmatpush1.msra.mxu0 0.0
    %1407 = vmatprep.subr.mxu0 0.0
    %1408 = vmatpush1.msra.mxu0 0.0
    %1409 = vmatprep.subr.mxu0 0.0
    %1410 = vmatpush1.msra.mxu0 0.0
    %1411 = vmatprep.subr.mxu0 0.0
    %1412 = vmatpush1.msra.mxu0 0.0
    %1413 = vmatprep.subr.mxu0 0.0
    %1414 = vmatpush1.msra.mxu0 0.0
    %1415 = vmatprep.subr.mxu0 0.0
    %1416 = vmatpush1.msra.mxu0 0.0
    %1417 = vmatprep.subr.mxu0 0.0
    %1418 = vmatpush1.msra.mxu0 0.0
    %1419 = vmatprep.mubr.f32.mxu0 0.0
    %1420 = vmatmul.mubr.f32.gmra.mrb[0].mxu0 %v1332
    %v1421 = vpop.f32.mrb[0].mxu0
    %v1422 = vadd.f32 %v1330, %v1421
    %v1423 = vpop.f32.mrb[0].mxu0
    %1424 = vmatprep.mubr.f32.mxu0 0.0
    %1425 = vmatmul.mubr.f32.gmra.mrb[0].mxu0 %v1335
    %v1426 = vpop.f32.mrb[0].mxu0
    %v1427 = vadd.f32 %v1330, %v1426
    %v1428 = vpop.f32.mrb[0].mxu0
    %1429 = vmatprep.mubr.f32.mxu0 0.0
    %1430 = vmatmul.mubr.f32.gmra.mrb[0].mxu0 %v1338
    %v1431 = vpop.f32.mrb[0].mxu0
    %v1432 = vadd.f32 %v1330, %v1431
    %v1433 = vpop.f32.mrb[0].mxu0
    %1434 = vmatprep.mubr.f32.mxu0 0.0
    %1435 = vmatmul.mubr.f32.gmra.mrb[0].mxu0 %v1341
    %v1436 = vpop.f32.mrb[0].mxu0
    %v1437 = vadd.f32 %v1330, %v1436
    %v1438 = vpop.f32.mrb[0].mxu0
    %1439 = vmatprep.mubr.f32.mxu0 0.0
    %1440 = vmatmul.mubr.f32.gmra.mrb[0].mxu0 %v1344
    %v1441 = vpop.f32.mrb[0].mxu0
    %v1442 = vadd.f32 %v1330, %v1441
    %v1443 = vpop.f32.mrb[0].mxu0
    %1444 = vmatprep.mubr.f32.mxu0 0.0
    %1445 = vmatmul.mubr.f32.gmra.mrb[0].mxu0 %v1347
    %v1446 = vpop.f32.mrb[0].mxu0
    %v1447 = vadd.f32 %v1330, %v1446
    %v1448 = vpop.f32.mrb[0].mxu0
    %1449 = vmatprep.mubr.f32.mxu0 0.0
    %1450 = vmatmul.mubr.f32.gmra.mrb[0].mxu0 %v1350
    %v1451 = vpop.f32.mrb[0].mxu0
    %v1452 = vadd.f32 %v1330, %v1451
    %v1453 = vpop.f32.mrb[0].mxu0
    %1454 = vmatprep.mubr.f32.mxu0 0.0
    %1455 = vmatmul.mubr.f32.gmra.mrb[0].mxu0 %v1353
    %v1456 = vpop.f32.mrb[0].mxu0
    %v1457 = vadd.f32 %v1330, %v1456
    %v1458 = vpop.f32.mrb[0].mxu0
    %1459 = vdwg.mxu0
    %v1460 = vxor.u32 %v1422, 2147483648
    %v1461 = vxor.u32 %v1427, 2147483648
    %v1462 = vxor.u32 %v1432, 2147483648
    %v1463 = vxor.u32 %v1437, 2147483648
    %v1464 = vxor.u32 %v1442, 2147483648
    %v1465 = vxor.u32 %v1447, 2147483648
    %v1466 = vxor.u32 %v1452, 2147483648
    %v1467 = vxor.u32 %v1457, 2147483648
    %v1468 = vmul.f32 %v1460, 1.442695
    %v1469 = vpow.pop %v1468
    %v1470 = vmul.f32 %v1461, 1.442695
    %v1471 = vpow.pop %v1470
    %v1472 = vmul.f32 %v1462, 1.442695
    %v1473 = vpow.pop %v1472
    %v1474 = vmul.f32 %v1463, 1.442695
    %v1475 = vpow.pop %v1474
    %v1476 = vmul.f32 %v1464, 1.442695
    %v1477 = vpow.pop %v1476
    %v1478 = vmul.f32 %v1465, 1.442695
    %v1479 = vpow.pop %v1478
    %v1480 = vmul.f32 %v1466, 1.442695
    %v1481 = vpow.pop %v1480
    %v1482 = vmul.f32 %v1467, 1.442695
    %v1483 = vpow.pop %v1482
    %v1484 = vadd.f32 %v1469, 1.0
    %v1485 = vadd.f32 %v1471, 1.0
    %v1486 = vadd.f32 %v1473, 1.0
    %v1487 = vadd.f32 %v1475, 1.0
    %v1488 = vadd.f32 %v1477, 1.0
    %v1489 = vadd.f32 %v1479, 1.0
    %v1490 = vadd.f32 %v1481, 1.0
    %v1491 = vadd.f32 %v1483, 1.0
    %v1492 = vrcp.pop %v1484
    %v1493 = vmul.f32 1.0, %v1492
    %v1494 = vrcp.pop %v1485
    %v1495 = vmul.f32 1.0, %v1494
    %v1496 = vrcp.pop %v1486
    %v1497 = vmul.f32 1.0, %v1496
    %v1498 = vrcp.pop %v1487
    %v1499 = vmul.f32 1.0, %v1498
    %v1500 = vrcp.pop %v1488
    %v1501 = vmul.f32 1.0, %v1500
    %v1502 = vrcp.pop %v1489
    %v1503 = vmul.f32 1.0, %v1502
    %v1504 = vrcp.pop %v1490
    %v1505 = vmul.f32 1.0, %v1504
    %v1506 = vrcp.pop %v1491
    %v1507 = vmul.f32 1.0, %v1506
    %1508 = vst.msk [vmem:[%s2] sm:$0xff] %vm63, %v1493
    %1509 = vst.msk [vmem:[%s2 + $0x8] sm:$0xff] %vm63, %v1495
    %1510 = vst.msk [vmem:[%s2 + $0x10] sm:$0xff] %vm63, %v1497
    %1511 = vst.msk [vmem:[%s2 + $0x18] sm:$0xff] %vm63, %v1499
    %1512 = vst.msk [vmem:[%s2 + $0x20] sm:$0xff] %vm63, %v1501
    %1513 = vst.msk [vmem:[%s2 + $0x28] sm:$0xff] %vm63, %v1503
    %1514 = vst.msk [vmem:[%s2 + $0x30] sm:$0xff] %vm63, %v1505
    %1515 = vst.msk [vmem:[%s2 + $0x38] sm:$0xff] %vm63, %v1507
    %1516 = vst.msk [vmem:[%s2 + $0x40] sm:$0xff] %vm63, %v1175
    // Predicated region
    $region14: #{tpu_custom_call.1} parent=1 // pred_check
      _
    $region15: #{tpu_custom_call.1} parent=1 // pred_check_branch
      %1518 = sbr.rel (0) target = $region17
    $region16: #{tpu_custom_call.1} parent=1 // pred_region
      _
    $region17: #{tpu_custom_call.1} parent=1 // pred_fallthru
      _
    // Predicated region
    $region18: #{tpu_custom_call.1} parent=1 // pred_check
      _
    $region19: #{tpu_custom_call.1} parent=1 // pred_check_branch
      %1520 = sbr.rel (0) target = $region21
    $region20: #{tpu_custom_call.1} parent=1 // pred_region
      _
    $region21: #{tpu_custom_call.1} parent=1 // pred_fallthru
      _
    %1521 = vsyncpa [#allocation4], 1

</llo_original>
